<compile_context>
chip_gen: v7x
topology: tpu7x:2x2x1
jax: 0.10.0
libtpu: 0.0.40
codegen_flags: <defaults>
</compile_context>

<pallas_src>
import functools

import numpy as np
import jax
import jax.numpy as jnp
from jax.experimental import pallas as pl
from jax.experimental.pallas import tpu as pltpu


# ------------------------------------------------------------------ kernel ---

def _mish(x):
    # mish(x) = x * tanh(softplus(x)) = x * (u-1)/(u+1), u = (1+e^x)^2.
    t = jnp.exp(jnp.minimum(x, 20.0))
    u = (1.0 + t) * (1.0 + t)
    return x * (u - 1.0) * pl.reciprocal(u + 1.0, approx=True)


def _csp2_kernel(x_ref, bmask_ref, mask_ref, cs_ref, cv1w_ref, cv1b_ref,
                 cv2w_ref, *rest, n, c_, c_r, taps):
    """Full BottleneckCSP2_Search forward for one batch tile (channel-major)."""
    m_refs = rest[:4 * n]
    catb1_ref, catb2_ref, cv3w_ref, cv3b_ref, o_ref, tap_ref = rest[4 * n:]

    f32, bf16 = jnp.float32, jnp.bfloat16
    mask = mask_ref[...]                 # (c_, 1) f32, search channel mask
    bmask = bmask_ref[...]               # (8, BP) f32, 3x3 boundary masks

    # Padded tap rows are never written; zero them so 0-weight * garbage can't
    # make NaN.  (Runs every step: the grid may be split across TensorCores.)
    if c_r != c_:
        tap_ref[...] = jnp.zeros_like(tap_ref)

    def mm(w_ref, a_bf):                 # (Co,K)bf16 @ (K,BP)bf16 -> f32 (MXU)
        return jnp.dot(w_ref[...], a_bf, preferred_element_type=f32)

    # cv1: 1x1 conv (BN scale folded into rows) + bias + Mish + channel mask.
    x1 = _mish(mm(cv1w_ref, x_ref[...]) + cv1b_ref[...]) * mask      # (c_,BP) f32
    x1_bf = x1.astype(bf16)                                          # cast once

    # Top-level cv2 (channel mask + concat-BN scale folded into weight rows).
    y2s = mm(cv2w_ref, x1_bf)                                        # (c_,BP) f32

    # Bottleneck chain with depth-search aggregation; cs already carries
    # coef[d] * bn_cat_scale_a, so y1 needs no extra per-channel scaling.
    m_out, m_bf = x1, x1_bf
    y1s = cs_ref[0] * m_out
    for i in range(n):
        w1_ref, b1_ref, w2m_ref, b2_ref = m_refs[4 * i:4 * i + 4]

        # Bottleneck cv1: 1x1 conv + bias + Mish + mask.
        h = _mish(mm(w1_ref, m_bf) + b1_ref[...]) * mask             # (c_,BP) f32

        # Bottleneck cv2: 3x3 conv as ONE matmul over the merged tap matrix.
        for t, (shift, bi) in enumerate(taps):
            if bi < 0:
                tap = h
            else:
                tap = pltpu.roll(h, shift=shift, axis=1) * bmask[bi:bi + 1]
            tap_ref[t * c_r:t * c_r + c_, :] = tap.astype(bf16)
        acc = jnp.dot(w2m_ref[...], tap_ref[...], preferred_element_type=f32)

        m_out = _mish(acc + b2_ref[...]) * mask
        m_bf = m_out.astype(bf16)
        y1s = y1s + cs_ref[i + 1] * m_out

    # cv3: the (y1|y2) concat is fused into one matmul via the tap scratch.
    tap_ref[0:c_, :] = _mish(y1s + catb1_ref[...]).astype(bf16)
    tap_ref[c_r:c_r + c_, :] = _mish(y2s + catb2_ref[...]).astype(bf16)
    z = jnp.dot(cv3w_ref[...], tap_ref[0:2 * c_r, :], preferred_element_type=f32)
    o_ref[...] = _mish(z + cv3b_ref[...]).astype(o_ref.dtype)


# --------------------------------------------------------------- parameters ---

def _bn_fold(bn, eps=1e-5):
    scale = bn['gamma'] / jnp.sqrt(bn['var'] + eps)
    bias = bn['beta'] - bn['mean'] * scale
    return scale, bias


def init_params(key, c1, c2, gamma_space, bottleneck_space):
    e = max(gamma_space)
    c_ = int(c2 * (e + 0.5))
    n = max(bottleneck_space)
    channel_values = [int((g + 0.5) * c2) for g in gamma_space]

    keys = iter(jax.random.split(key, 256))

    def w1x1(cout, cin):
        return 0.1 * jax.random.normal(next(keys), (cout, cin), jnp.float32)

    def w3x3(cout, cin):
        w = 0.1 * jax.random.normal(next(keys), (cout, cin, 3, 3), jnp.float32)
        # (ky, kx, Cout, Cin) -> (9, Cout, Cin); tap t = (dy+1)*3 + (dx+1).
        return jnp.transpose(w, (2, 3, 0, 1)).reshape(9, cout, cin)

    def bn_p(c):
        return {
            'gamma': 1.0 + 0.1 * jax.random.normal(next(keys), (c,), jnp.float32),
            'beta': 0.05 * jax.random.normal(next(keys), (c,), jnp.float32),
            'mean': 0.02 * jax.random.normal(next(keys), (c,), jnp.float32),
            'var': jnp.abs(1.0 + 0.1 * jax.random.normal(next(keys), (c,), jnp.float32)),
        }

    masks = jnp.zeros((len(gamma_space), max(channel_values)), jnp.float32)
    for idx, nc in enumerate(channel_values):
        masks = masks.at[idx, :nc].set(1.0)

    return {
        'c_': c_, 'c2': c2, 'n': n,
        'bottleneck_space': list(bottleneck_space),
        'channel_masks': masks,
        'cv1_w': w1x1(c_, c1), 'cv1_bn': bn_p(c_),
        'cv2_w': w1x1(c_, c_),                        # plain conv, no bn/act
        'cv3_w': w1x1(c2, 2 * c_), 'cv3_bn': bn_p(c2),
        'bn_cat': bn_p(2 * c_),
        'm': [{'cv1_w': w1x1(c_, c_), 'cv1_bn': bn_p(c_),
               'cv2_w': w3x3(c_, c_), 'cv2_bn': bn_p(c_)}
              for _ in range(n)],
    }


# ------------------------------------------------------------------ forward ---

def _pick_b_tile(n_imgs, cap=8):
    """Largest divisor of n_imgs <= cap that keeps >= 2 grid steps (megacore)."""
    best = 1
    for t in range(1, min(n_imgs, cap) + 1):
        if n_imgs % t == 0 and (n_imgs // t >= 2 or n_imgs == 1):
            best = t
    return best


def forward(params, x_nchw, args=None, out_dtype=jnp.bfloat16):
    N, C1, H, W = x_nchw.shape
    P = H * W
    c_, c2, n = params['c_'], params['c2'], params['n']
    c_r = -(-c_ // 8) * 8                 # sublane-aligned tap row stride
    bf, f32 = jnp.bfloat16, jnp.float32

    B_TILE = _pick_b_tile(N)
    BP = B_TILE * P
    grid = (N // B_TILE,)

    # ---- search-space coefficients ---------------------------------------
    if args is not None and args.get('gamma', None) is not None:
        mask_vec = jnp.einsum('gc,g->c', params['channel_masks'],
                              args['gamma'].astype(f32))
    else:
        mask_vec = jnp.ones((c_,), f32)

    if args is not None and args.get('n_bottlenecks', None) is not None:
        coef = jnp.zeros((n + 1,), f32)
        for idx, dval in enumerate(params['bottleneck_space']):
            coef = coef.at[dval].set(args['n_bottlenecks'][idx].astype(f32))
    else:
        coef = jnp.zeros((n + 1,), f32).at[n].set(1.0)

    # ---- host-side folds (BN scales into weight rows) --------------------
    s1, b1 = _bn_fold(params['cv1_bn'])
    scat, bcat = _bn_fold(params['bn_cat'])
    s3, b3 = _bn_fold(params['cv3_bn'])

    cv1w = (s1[:, None] * params['cv1_w']).astype(bf)
    # PyTorch: y2 = cv2(x1) * mask, then bn_cat scale -> fold both into rows.
    cv2w = ((scat[c_:] * mask_vec)[:, None] * params['cv2_w']).astype(bf)
    # y1 path: fold coef[d] * bn_cat_scale_a into per-depth coefficients.
    cs = (coef[:, None] * scat[:c_][None, :]).reshape(n + 1, c_, 1)

    w3m = jnp.zeros((c2, 2 * c_r), f32)
    w3m = w3m.at[:, 0:c_].set(s3[:, None] * params['cv3_w'][:, :c_])
    w3m = w3m.at[:, c_r:c_r + c_].set(s3[:, None] * params['cv3_w'][:, c_:])
    w3m = w3m.astype(bf)

    m_inputs = []
    for bp in params['m']:
        ms1, mb1 = _bn_fold(bp['cv1_bn'])
        ms2, mb2 = _bn_fold(bp['cv2_bn'])
        w1 = (ms1[:, None] * bp['cv1_w']).astype(bf)
        w2m = jnp.zeros((c_, 9 * c_r), f32)
        for t in range(9):
            w2m = w2m.at[:, t * c_r:t * c_r + c_].set(ms2[:, None] * bp['cv2_w'][t])
        m_inputs += [w1, mb1.reshape(c_, 1), w2m.astype(bf), mb2.reshape(c_, 1)]

    # ---- host-precomputed 3x3 boundary masks & roll table -----------------
    pp = np.arange(P)
    hh, ww = pp // W, pp % W
    bmask_rows, taps = [], []
    bi = 0
    for dy in (-1, 0, 1):
        for dx in (-1, 0, 1):
            if dy == 0 and dx == 0:
                taps.append((0, -1))
            else:
                valid = ((hh + dy >= 0) & (hh + dy < H) &
                         (ww + dx >= 0) & (ww + dx < W))
                bmask_rows.append(valid.astype(np.float32))
                taps.append(((-(dy * W + dx)) % BP, bi))
                bi += 1
    bmask = jnp.asarray(np.tile(np.stack(bmask_rows, 0), (1, B_TILE)))   # (8, BP)

    # ---- channel-major, batch-on-lanes layout -----------------------------
    x2d = x_nchw.reshape(N, C1, P).transpose(1, 0, 2).reshape(C1, N * P).astype(bf)

    inputs, in_specs = [], []

    def add(a, spec=None):
        inputs.append(a)
        if spec is None:                       # grid-invariant, resident block
            nd = a.ndim
            spec = pl.BlockSpec(a.shape, lambda b, _nd=nd: (0,) * _nd)
        in_specs.append(spec)

    add(x2d, pl.BlockSpec((C1, BP), lambda b: (0, b)))
    add(bmask)
    add(mask_vec.reshape(c_, 1))
    add(cs)
    add(cv1w)
    add(b1.reshape(c_, 1))
    add(cv2w)
    for a in m_inputs:
        add(a)
    add(bcat[:c_].reshape(c_, 1))
    add(bcat[c_:].reshape(c_, 1))
    add(w3m)
    add(b3.reshape(c2, 1))

    kernel = functools.partial(_csp2_kernel, n=n, c_=c_, c_r=c_r,
                               taps=tuple(taps))

    # VMEM budget: double-buffered x/out blocks + (2x-buffered) invariant
    # weights + tap scratch + ~6 live f32 intermediates; clamp for v7x (64 MiB).
    w_bytes = sum(int(np.prod(a.shape)) * a.dtype.itemsize for a in inputs[1:])
    est = (2 * (C1 + c2) * BP * 2 + 2 * w_bytes
           + 9 * c_r * BP * 2 + 6 * c_ * BP * 4)
    vmem_limit = int(min(60 * 2 ** 20, max(16 * 2 ** 20, 2 * est)))

    out = pl.pallas_call(
        kernel,
        out_shape=jax.ShapeDtypeStruct((c2, N * P), out_dtype),
        grid=grid,
        in_specs=in_specs,
        out_specs=pl.BlockSpec((c2, BP), lambda b: (0, b)),
        scratch_shapes=[pltpu.VMEM((9 * c_r, BP), jnp.bfloat16)],
        compiler_params=pltpu.CompilerParams(
            dimension_semantics=("parallel",),
            vmem_limit_bytes=vmem_limit),
    )(*inputs)

    return out.reshape(c2, N, P).transpose(1, 0, 2).reshape(N, c2, H, W)


# --------------------------------------------------------------------- main ---

if __name__ == "__main__":
    key = jax.random.PRNGKey(0)
    pkey, xkey = jax.random.split(key)

    c1, c2 = 4, 4
    gamma_space = [0.25, 0.5]        # e = 0.5 -> c_ = int(4 * 1.0) = 4
    bottleneck_space = [1, 2]        # n = 2 bottlenecks

    params = init_params(pkey, c1, c2, gamma_space, bottleneck_space)
    x = jax.random.normal(xkey, (2, c1, 16, 16), jnp.float32)

    gamma = jnp.array([0.3, 0.7], jnp.float32)
    depth = jnp.array([0.4, 0.6], jnp.float32)

    # Search path (gamma + depth distributions), jitted wrapper.
    fwd_search = jax.jit(lambda xv, gv, dv: forward(
        params, xv, {'gamma': gv, 'n_bottlenecks': dv}))
    out = jax.block_until_ready(fwd_search(x, gamma, depth))
    assert out.shape == (2, c2, 16, 16)
    assert bool(jnp.all(jnp.isfinite(out.astype(jnp.float32))))

    # Plain path (args=None): full-depth chain, unit mask.
    out_plain = jax.block_until_ready(forward(params, x, None))
    assert out_plain.shape == (2, c2, 16, 16)
    assert bool(jnp.all(jnp.isfinite(out_plain.astype(jnp.float32))))

    print("KERNEL_OK")
</pallas_src>

<mosaic_0001>
module attributes {stable_mosaic.version = 11 : i64} {
  func.func @_csp2_kernel(%arg0: i32, %arg1: memref<4x256xbf16, #tpu.memory_space<vmem>>, %arg2: memref<8x256xf32, #tpu.memory_space<vmem>>, %arg3: memref<4x1xf32, #tpu.memory_space<vmem>>, %arg4: memref<3x4x1xf32, #tpu.memory_space<vmem>>, %arg5: memref<4x4xbf16, #tpu.memory_space<vmem>>, %arg6: memref<4x1xf32, #tpu.memory_space<vmem>>, %arg7: memref<4x4xbf16, #tpu.memory_space<vmem>>, %arg8: memref<4x4xbf16, #tpu.memory_space<vmem>>, %arg9: memref<4x1xf32, #tpu.memory_space<vmem>>, %arg10: memref<4x72xbf16, #tpu.memory_space<vmem>>, %arg11: memref<4x1xf32, #tpu.memory_space<vmem>>, %arg12: memref<4x4xbf16, #tpu.memory_space<vmem>>, %arg13: memref<4x1xf32, #tpu.memory_space<vmem>>, %arg14: memref<4x72xbf16, #tpu.memory_space<vmem>>, %arg15: memref<4x1xf32, #tpu.memory_space<vmem>>, %arg16: memref<4x1xf32, #tpu.memory_space<vmem>>, %arg17: memref<4x1xf32, #tpu.memory_space<vmem>>, %arg18: memref<4x16xbf16, #tpu.memory_space<vmem>>, %arg19: memref<4x1xf32, #tpu.memory_space<vmem>>, %arg20: memref<4x256xbf16, #tpu.memory_space<vmem>>, %arg21: memref<72x256xbf16, #tpu.memory_space<vmem>>) attributes {dimension_semantics = [#tpu.dimension_semantics<parallel>], iteration_bounds = array<i64: 2>, scalar_prefetch = 0 : i64, scratch_operands = 1 : i64, tpu.core_type = #tpu.core_type<tc>, window_params = [{transform_indices = @transform_0, window_bounds = array<i64: 4, 256>}, {pipeline_mode = #tpu.pipeline_mode<synchronous>, transform_indices = @transform_1, window_bounds = array<i64: 8, 256>}, {pipeline_mode = #tpu.pipeline_mode<synchronous>, transform_indices = @transform_2, window_bounds = array<i64: 4, 1>}, {pipeline_mode = #tpu.pipeline_mode<synchronous>, transform_indices = @transform_3, window_bounds = array<i64: 3, 4, 1>}, {pipeline_mode = #tpu.pipeline_mode<synchronous>, transform_indices = @transform_4, window_bounds = array<i64: 4, 4>}, {pipeline_mode = #tpu.pipeline_mode<synchronous>, transform_indices = @transform_5, window_bounds = array<i64: 4, 1>}, {pipeline_mode = #tpu.pipeline_mode<synchronous>, transform_indices = @transform_6, window_bounds = array<i64: 4, 4>}, {pipeline_mode = #tpu.pipeline_mode<synchronous>, transform_indices = @transform_7, window_bounds = array<i64: 4, 4>}, {pipeline_mode = #tpu.pipeline_mode<synchronous>, transform_indices = @transform_8, window_bounds = array<i64: 4, 1>}, {pipeline_mode = #tpu.pipeline_mode<synchronous>, transform_indices = @transform_9, window_bounds = array<i64: 4, 72>}, {pipeline_mode = #tpu.pipeline_mode<synchronous>, transform_indices = @transform_10, window_bounds = array<i64: 4, 1>}, {pipeline_mode = #tpu.pipeline_mode<synchronous>, transform_indices = @transform_11, window_bounds = array<i64: 4, 4>}, {pipeline_mode = #tpu.pipeline_mode<synchronous>, transform_indices = @transform_12, window_bounds = array<i64: 4, 1>}, {pipeline_mode = #tpu.pipeline_mode<synchronous>, transform_indices = @transform_13, window_bounds = array<i64: 4, 72>}, {pipeline_mode = #tpu.pipeline_mode<synchronous>, transform_indices = @transform_14, window_bounds = array<i64: 4, 1>}, {pipeline_mode = #tpu.pipeline_mode<synchronous>, transform_indices = @transform_15, window_bounds = array<i64: 4, 1>}, {pipeline_mode = #tpu.pipeline_mode<synchronous>, transform_indices = @transform_16, window_bounds = array<i64: 4, 1>}, {pipeline_mode = #tpu.pipeline_mode<synchronous>, transform_indices = @transform_17, window_bounds = array<i64: 4, 16>}, {pipeline_mode = #tpu.pipeline_mode<synchronous>, transform_indices = @transform_18, window_bounds = array<i64: 4, 1>}, {transform_indices = @transform_19, window_bounds = array<i64: 4, 256>}]} {
    %c0 = arith.constant 0 : index
    %c0_0 = arith.constant 0 : index
    %0 = vector.load %arg3[%c0, %c0_0] : memref<4x1xf32, #tpu.memory_space<vmem>>, vector<4x1xf32>
    %c0_1 = arith.constant 0 : index
    %c0_2 = arith.constant 0 : index
    %1 = vector.load %arg2[%c0_1, %c0_2] : memref<8x256xf32, #tpu.memory_space<vmem>>, vector<8x256xf32>
    %cst = arith.constant 0.000000e+00 : bf16
    %2 = vector.broadcast %cst : bf16 to vector<72x256xbf16>
    %c0_3 = arith.constant 0 : index
    %c0_4 = arith.constant 0 : index
    %3 = vector.load %arg21[%c0_3, %c0_4] : memref<72x256xbf16, #tpu.memory_space<vmem>>, vector<72x256xbf16>
    tpu.vector_store %arg21[%c0_3, %c0_4], %2 {strides = array<i32>} : memref<72x256xbf16, #tpu.memory_space<vmem>>, vector<72x256xbf16>,
    %c0_5 = arith.constant 0 : index
    %c0_6 = arith.constant 0 : index
    %4 = vector.load %arg1[%c0_5, %c0_6] : memref<4x256xbf16, #tpu.memory_space<vmem>>, vector<4x256xbf16>
    %c0_7 = arith.constant 0 : index
    %c0_8 = arith.constant 0 : index
    %5 = vector.load %arg5[%c0_7, %c0_8] : memref<4x4xbf16, #tpu.memory_space<vmem>>, vector<4x4xbf16>
    %cst_9 = arith.constant dense<0.000000e+00> : vector<4x256xf32>
    %6 = tpu.matmul %5, %4, %cst_9 {dimension_numbers = #tpu.dot_dimension_numbers<[1], [0], [0], [1], [0, 0, 1, 1], [], []>} : vector<4x4xbf16>, vector<4x256xbf16>, vector<4x256xf32> -> vector<4x256xf32>
    %c0_10 = arith.constant 0 : index
    %c0_11 = arith.constant 0 : index
    %7 = vector.load %arg6[%c0_10, %c0_11] : memref<4x1xf32, #tpu.memory_space<vmem>>, vector<4x1xf32>
    %8 = vector.broadcast %7 : vector<4x1xf32> to vector<4x256xf32>
    %9 = arith.addf %6, %8 : vector<4x256xf32>
    %cst_12 = arith.constant 2.000000e+01 : f32
    %10 = vector.broadcast %cst_12 : f32 to vector<4x256xf32>
    %11 = arith.minimumf %9, %10 : vector<4x256xf32>
    %12 = math.exp %11 : vector<4x256xf32>
    %cst_13 = arith.constant 1.000000e+00 : f32
    %13 = vector.broadcast %cst_13 : f32 to vector<4x256xf32>
    %14 = arith.addf %13, %12 : vector<4x256xf32>
    %cst_14 = arith.constant 1.000000e+00 : f32
    %15 = vector.broadcast %cst_14 : f32 to vector<4x256xf32>
    %16 = arith.addf %15, %12 : vector<4x256xf32>
    %17 = arith.mulf %14, %16 : vector<4x256xf32>
    %cst_15 = arith.constant 1.000000e+00 : f32
    %18 = vector.broadcast %cst_15 : f32 to vector<4x256xf32>
    %19 = arith.subf %17, %18 : vector<4x256xf32>
    %20 = arith.mulf %9, %19 : vector<4x256xf32>
    %cst_16 = arith.constant 1.000000e+00 : f32
    %21 = vector.broadcast %cst_16 : f32 to vector<4x256xf32>
    %22 = arith.addf %17, %21 : vector<4x256xf32>
    %23 = tpu.reciprocal %22 {approx = true} : vector<4x256xf32> -> vector<4x256xf32>
    %24 = arith.mulf %20, %23 : vector<4x256xf32>
    %25 = vector.broadcast %0 : vector<4x1xf32> to vector<4x256xf32>
    %26 = arith.mulf %24, %25 : vector<4x256xf32>
    %27 = arith.truncf %26 : vector<4x256xf32> to vector<4x256xbf16>
    %c0_17 = arith.constant 0 : index
    %c0_18 = arith.constant 0 : index
    %28 = vector.load %arg7[%c0_17, %c0_18] : memref<4x4xbf16, #tpu.memory_space<vmem>>, vector<4x4xbf16>
    %cst_19 = arith.constant dense<0.000000e+00> : vector<4x256xf32>
    %29 = tpu.matmul %28, %27, %cst_19 {dimension_numbers = #tpu.dot_dimension_numbers<[1], [0], [0], [1], [0, 0, 1, 1], [], []>} : vector<4x4xbf16>, vector<4x256xbf16>, vector<4x256xf32> -> vector<4x256xf32>
    %c0_20 = arith.constant 0 : index
    %c0_21 = arith.constant 0 : index
    %c0_22 = arith.constant 0 : index
    %30 = vector.load %arg4[%c0_20, %c0_21, %c0_22] : memref<3x4x1xf32, #tpu.memory_space<vmem>>, vector<1x4x1xf32>
    %31 = vector.shape_cast %30 : vector<1x4x1xf32> to vector<4x1xf32>
    %32 = vector.broadcast %31 : vector<4x1xf32> to vector<4x256xf32>
    %33 = arith.mulf %32, %26 : vector<4x256xf32>
    %c0_23 = arith.constant 0 : index
    %c0_24 = arith.constant 0 : index
    %34 = vector.load %arg8[%c0_23, %c0_24] : memref<4x4xbf16, #tpu.memory_space<vmem>>, vector<4x4xbf16>
    %cst_25 = arith.constant dense<0.000000e+00> : vector<4x256xf32>
    %35 = tpu.matmul %34, %27, %cst_25 {dimension_numbers = #tpu.dot_dimension_numbers<[1], [0], [0], [1], [0, 0, 1, 1], [], []>} : vector<4x4xbf16>, vector<4x256xbf16>, vector<4x256xf32> -> vector<4x256xf32>
    %c0_26 = arith.constant 0 : index
    %c0_27 = arith.constant 0 : index
    %36 = vector.load %arg9[%c0_26, %c0_27] : memref<4x1xf32, #tpu.memory_space<vmem>>, vector<4x1xf32>
    %37 = vector.broadcast %36 : vector<4x1xf32> to vector<4x256xf32>
    %38 = arith.addf %35, %37 : vector<4x256xf32>
    %cst_28 = arith.constant 2.000000e+01 : f32
    %39 = vector.broadcast %cst_28 : f32 to vector<4x256xf32>
    %40 = arith.minimumf %38, %39 : vector<4x256xf32>
    %41 = math.exp %40 : vector<4x256xf32>
    %cst_29 = arith.constant 1.000000e+00 : f32
    %42 = vector.broadcast %cst_29 : f32 to vector<4x256xf32>
    %43 = arith.addf %42, %41 : vector<4x256xf32>
    %cst_30 = arith.constant 1.000000e+00 : f32
    %44 = vector.broadcast %cst_30 : f32 to vector<4x256xf32>
    %45 = arith.addf %44, %41 : vector<4x256xf32>
    %46 = arith.mulf %43, %45 : vector<4x256xf32>
    %cst_31 = arith.constant 1.000000e+00 : f32
    %47 = vector.broadcast %cst_31 : f32 to vector<4x256xf32>
    %48 = arith.subf %46, %47 : vector<4x256xf32>
    %49 = arith.mulf %38, %48 : vector<4x256xf32>
    %cst_32 = arith.constant 1.000000e+00 : f32
    %50 = vector.broadcast %cst_32 : f32 to vector<4x256xf32>
    %51 = arith.addf %46, %50 : vector<4x256xf32>
    %52 = tpu.reciprocal %51 {approx = true} : vector<4x256xf32> -> vector<4x256xf32>
    %53 = arith.mulf %49, %52 : vector<4x256xf32>
    %54 = vector.broadcast %0 : vector<4x1xf32> to vector<4x256xf32>
    %55 = arith.mulf %53, %54 : vector<4x256xf32>
    %c17_i32 = arith.constant 17 : i32
    %56 = tpu.dynamic_rotate %55 by %c17_i32 dim 1 : vector<4x256xf32>, i32 -> vector<4x256xf32>
    %57 = vector.extract_strided_slice %1 {offsets = [0, 0], sizes = [1, 256], strides = [1, 1]} : vector<8x256xf32> to vector<1x256xf32>
    %58 = vector.broadcast %57 : vector<1x256xf32> to vector<4x256xf32>
    %59 = arith.mulf %56, %58 : vector<4x256xf32>
    %60 = arith.truncf %59 : vector<4x256xf32> to vector<4x256xbf16>
    %c0_33 = arith.constant 0 : index
    %c0_34 = arith.constant 0 : index
    %61 = vector.load %arg21[%c0_33, %c0_34] : memref<72x256xbf16, #tpu.memory_space<vmem>>, vector<4x256xbf16>
    tpu.vector_store %arg21[%c0_33, %c0_34], %60 {strides = array<i32>} : memref<72x256xbf16, #tpu.memory_space<vmem>>, vector<4x256xbf16>,
    %c16_i32 = arith.constant 16 : i32
    %62 = tpu.dynamic_rotate %55 by %c16_i32 dim 1 : vector<4x256xf32>, i32 -> vector<4x256xf32>
    %63 = vector.extract_strided_slice %1 {offsets = [1, 0], sizes = [1, 256], strides = [1, 1]} : vector<8x256xf32> to vector<1x256xf32>
    %64 = vector.broadcast %63 : vector<1x256xf32> to vector<4x256xf32>
    %65 = arith.mulf %62, %64 : vector<4x256xf32>
    %66 = arith.truncf %65 : vector<4x256xf32> to vector<4x256xbf16>
    %c8 = arith.constant 8 : index
    %c0_35 = arith.constant 0 : index
    %67 = vector.load %arg21[%c8, %c0_35] : memref<72x256xbf16, #tpu.memory_space<vmem>>, vector<4x256xbf16>
    tpu.vector_store %arg21[%c8, %c0_35], %66 {strides = array<i32>} : memref<72x256xbf16, #tpu.memory_space<vmem>>, vector<4x256xbf16>,
    %c15_i32 = arith.constant 15 : i32
    %68 = tpu.dynamic_rotate %55 by %c15_i32 dim 1 : vector<4x256xf32>, i32 -> vector<4x256xf32>
    %69 = vector.extract_strided_slice %1 {offsets = [2, 0], sizes = [1, 256], strides = [1, 1]} : vector<8x256xf32> to vector<1x256xf32>
    %70 = vector.broadcast %69 : vector<1x256xf32> to vector<4x256xf32>
    %71 = arith.mulf %68, %70 : vector<4x256xf32>
    %72 = arith.truncf %71 : vector<4x256xf32> to vector<4x256xbf16>
    %c16 = arith.constant 16 : index
    %c0_36 = arith.constant 0 : index
    %73 = vector.load %arg21[%c16, %c0_36] : memref<72x256xbf16, #tpu.memory_space<vmem>>, vector<4x256xbf16>
    tpu.vector_store %arg21[%c16, %c0_36], %72 {strides = array<i32>} : memref<72x256xbf16, #tpu.memory_space<vmem>>, vector<4x256xbf16>,
    %c1_i32 = arith.constant 1 : i32
    %74 = tpu.dynamic_rotate %55 by %c1_i32 dim 1 : vector<4x256xf32>, i32 -> vector<4x256xf32>
    %75 = vector.extract_strided_slice %1 {offsets = [3, 0], sizes = [1, 256], strides = [1, 1]} : vector<8x256xf32> to vector<1x256xf32>
    %76 = vector.broadcast %75 : vector<1x256xf32> to vector<4x256xf32>
    %77 = arith.mulf %74, %76 : vector<4x256xf32>
    %78 = arith.truncf %77 : vector<4x256xf32> to vector<4x256xbf16>
    %c24 = arith.constant 24 : index
    %c0_37 = arith.constant 0 : index
    %79 = vector.load %arg21[%c24, %c0_37] : memref<72x256xbf16, #tpu.memory_space<vmem>>, vector<4x256xbf16>
    tpu.vector_store %arg21[%c24, %c0_37], %78 {strides = array<i32>} : memref<72x256xbf16, #tpu.memory_space<vmem>>, vector<4x256xbf16>,
    %80 = arith.truncf %55 : vector<4x256xf32> to vector<4x256xbf16>
    %c32 = arith.constant 32 : index
    %c0_38 = arith.constant 0 : index
    %81 = vector.load %arg21[%c32, %c0_38] : memref<72x256xbf16, #tpu.memory_space<vmem>>, vector<4x256xbf16>
    tpu.vector_store %arg21[%c32, %c0_38], %80 {strides = array<i32>} : memref<72x256xbf16, #tpu.memory_space<vmem>>, vector<4x256xbf16>,
    %c255_i32 = arith.constant 255 : i32
    %82 = tpu.dynamic_rotate %55 by %c255_i32 dim 1 : vector<4x256xf32>, i32 -> vector<4x256xf32>
    %83 = vector.extract_strided_slice %1 {offsets = [4, 0], sizes = [1, 256], strides = [1, 1]} : vector<8x256xf32> to vector<1x256xf32>
    %84 = vector.broadcast %83 : vector<1x256xf32> to vector<4x256xf32>
    %85 = arith.mulf %82, %84 : vector<4x256xf32>
    %86 = arith.truncf %85 : vector<4x256xf32> to vector<4x256xbf16>
    %c40 = arith.constant 40 : index
    %c0_39 = arith.constant 0 : index
    %87 = vector.load %arg21[%c40, %c0_39] : memref<72x256xbf16, #tpu.memory_space<vmem>>, vector<4x256xbf16>
    tpu.vector_store %arg21[%c40, %c0_39], %86 {strides = array<i32>} : memref<72x256xbf16, #tpu.memory_space<vmem>>, vector<4x256xbf16>,
    %c241_i32 = arith.constant 241 : i32
    %88 = tpu.dynamic_rotate %55 by %c241_i32 dim 1 : vector<4x256xf32>, i32 -> vector<4x256xf32>
    %89 = vector.extract_strided_slice %1 {offsets = [5, 0], sizes = [1, 256], strides = [1, 1]} : vector<8x256xf32> to vector<1x256xf32>
    %90 = vector.broadcast %89 : vector<1x256xf32> to vector<4x256xf32>
    %91 = arith.mulf %88, %90 : vector<4x256xf32>
    %92 = arith.truncf %91 : vector<4x256xf32> to vector<4x256xbf16>
    %c48 = arith.constant 48 : index
    %c0_40 = arith.constant 0 : index
    %93 = vector.load %arg21[%c48, %c0_40] : memref<72x256xbf16, #tpu.memory_space<vmem>>, vector<4x256xbf16>
    tpu.vector_store %arg21[%c48, %c0_40], %92 {strides = array<i32>} : memref<72x256xbf16, #tpu.memory_space<vmem>>, vector<4x256xbf16>,
    %c240_i32 = arith.constant 240 : i32
    %94 = tpu.dynamic_rotate %55 by %c240_i32 dim 1 : vector<4x256xf32>, i32 -> vector<4x256xf32>
    %95 = vector.extract_strided_slice %1 {offsets = [6, 0], sizes = [1, 256], strides = [1, 1]} : vector<8x256xf32> to vector<1x256xf32>
    %96 = vector.broadcast %95 : vector<1x256xf32> to vector<4x256xf32>
    %97 = arith.mulf %94, %96 : vector<4x256xf32>
    %98 = arith.truncf %97 : vector<4x256xf32> to vector<4x256xbf16>
    %c56 = arith.constant 56 : index
    %c0_41 = arith.constant 0 : index
    %99 = vector.load %arg21[%c56, %c0_41] : memref<72x256xbf16, #tpu.memory_space<vmem>>, vector<4x256xbf16>
    tpu.vector_store %arg21[%c56, %c0_41], %98 {strides = array<i32>} : memref<72x256xbf16, #tpu.memory_space<vmem>>, vector<4x256xbf16>,
    %c239_i32 = arith.constant 239 : i32
    %100 = tpu.dynamic_rotate %55 by %c239_i32 dim 1 : vector<4x256xf32>, i32 -> vector<4x256xf32>
    %101 = vector.extract_strided_slice %1 {offsets = [7, 0], sizes = [1, 256], strides = [1, 1]} : vector<8x256xf32> to vector<1x256xf32>
    %102 = vector.broadcast %101 : vector<1x256xf32> to vector<4x256xf32>
    %103 = arith.mulf %100, %102 : vector<4x256xf32>
    %104 = arith.truncf %103 : vector<4x256xf32> to vector<4x256xbf16>
    %c64 = arith.constant 64 : index
    %c0_42 = arith.constant 0 : index
    %105 = vector.load %arg21[%c64, %c0_42] : memref<72x256xbf16, #tpu.memory_space<vmem>>, vector<4x256xbf16>
    tpu.vector_store %arg21[%c64, %c0_42], %104 {strides = array<i32>} : memref<72x256xbf16, #tpu.memory_space<vmem>>, vector<4x256xbf16>,
    %c0_43 = arith.constant 0 : index
    %c0_44 = arith.constant 0 : index
    %106 = vector.load %arg10[%c0_43, %c0_44] : memref<4x72xbf16, #tpu.memory_space<vmem>>, vector<4x72xbf16>
    %c0_45 = arith.constant 0 : index
    %c0_46 = arith.constant 0 : index
    %107 = vector.load %arg21[%c0_45, %c0_46] : memref<72x256xbf16, #tpu.memory_space<vmem>>, vector<72x256xbf16>
    %cst_47 = arith.constant dense<0.000000e+00> : vector<4x256xf32>
    %108 = tpu.matmul %106, %107, %cst_47 {dimension_numbers = #tpu.dot_dimension_numbers<[1], [0], [0], [1], [0, 0, 1, 1], [], []>} : vector<4x72xbf16>, vector<72x256xbf16>, vector<4x256xf32> -> vector<4x256xf32>
    %c0_48 = arith.constant 0 : index
    %c0_49 = arith.constant 0 : index
    %109 = vector.load %arg11[%c0_48, %c0_49] : memref<4x1xf32, #tpu.memory_space<vmem>>, vector<4x1xf32>
    %110 = vector.broadcast %109 : vector<4x1xf32> to vector<4x256xf32>
    %111 = arith.addf %108, %110 : vector<4x256xf32>
    %cst_50 = arith.constant 2.000000e+01 : f32
    %112 = vector.broadcast %cst_50 : f32 to vector<4x256xf32>
    %113 = arith.minimumf %111, %112 : vector<4x256xf32>
    %114 = math.exp %113 : vector<4x256xf32>
    %cst_51 = arith.constant 1.000000e+00 : f32
    %115 = vector.broadcast %cst_51 : f32 to vector<4x256xf32>
    %116 = arith.addf %115, %114 : vector<4x256xf32>
    %cst_52 = arith.constant 1.000000e+00 : f32
    %117 = vector.broadcast %cst_52 : f32 to vector<4x256xf32>
    %118 = arith.addf %117, %114 : vector<4x256xf32>
    %119 = arith.mulf %116, %118 : vector<4x256xf32>
    %cst_53 = arith.constant 1.000000e+00 : f32
    %120 = vector.broadcast %cst_53 : f32 to vector<4x256xf32>
    %121 = arith.subf %119, %120 : vector<4x256xf32>
    %122 = arith.mulf %111, %121 : vector<4x256xf32>
    %cst_54 = arith.constant 1.000000e+00 : f32
    %123 = vector.broadcast %cst_54 : f32 to vector<4x256xf32>
    %124 = arith.addf %119, %123 : vector<4x256xf32>
    %125 = tpu.reciprocal %124 {approx = true} : vector<4x256xf32> -> vector<4x256xf32>
    %126 = arith.mulf %122, %125 : vector<4x256xf32>
    %127 = vector.broadcast %0 : vector<4x1xf32> to vector<4x256xf32>
    %128 = arith.mulf %126, %127 : vector<4x256xf32>
    %129 = arith.truncf %128 : vector<4x256xf32> to vector<4x256xbf16>
    %c1 = arith.constant 1 : index
    %c0_55 = arith.constant 0 : index
    %c0_56 = arith.constant 0 : index
    %130 = vector.load %arg4[%c1, %c0_55, %c0_56] : memref<3x4x1xf32, #tpu.memory_space<vmem>>, vector<1x4x1xf32>
    %131 = vector.shape_cast %130 : vector<1x4x1xf32> to vector<4x1xf32>
    %132 = vector.broadcast %131 : vector<4x1xf32> to vector<4x256xf32>
    %133 = arith.mulf %132, %128 : vector<4x256xf32>
    %134 = arith.addf %33, %133 : vector<4x256xf32>
    %c0_57 = arith.constant 0 : index
    %c0_58 = arith.constant 0 : index
    %135 = vector.load %arg12[%c0_57, %c0_58] : memref<4x4xbf16, #tpu.memory_space<vmem>>, vector<4x4xbf16>
    %cst_59 = arith.constant dense<0.000000e+00> : vector<4x256xf32>
    %136 = tpu.matmul %135, %129, %cst_59 {dimension_numbers = #tpu.dot_dimension_numbers<[1], [0], [0], [1], [0, 0, 1, 1], [], []>} : vector<4x4xbf16>, vector<4x256xbf16>, vector<4x256xf32> -> vector<4x256xf32>
    %c0_60 = arith.constant 0 : index
    %c0_61 = arith.constant 0 : index
    %137 = vector.load %arg13[%c0_60, %c0_61] : memref<4x1xf32, #tpu.memory_space<vmem>>, vector<4x1xf32>
    %138 = vector.broadcast %137 : vector<4x1xf32> to vector<4x256xf32>
    %139 = arith.addf %136, %138 : vector<4x256xf32>
    %cst_62 = arith.constant 2.000000e+01 : f32
    %140 = vector.broadcast %cst_62 : f32 to vector<4x256xf32>
    %141 = arith.minimumf %139, %140 : vector<4x256xf32>
    %142 = math.exp %141 : vector<4x256xf32>
    %cst_63 = arith.constant 1.000000e+00 : f32
    %143 = vector.broadcast %cst_63 : f32 to vector<4x256xf32>
    %144 = arith.addf %143, %142 : vector<4x256xf32>
    %cst_64 = arith.constant 1.000000e+00 : f32
    %145 = vector.broadcast %cst_64 : f32 to vector<4x256xf32>
    %146 = arith.addf %145, %142 : vector<4x256xf32>
    %147 = arith.mulf %144, %146 : vector<4x256xf32>
    %cst_65 = arith.constant 1.000000e+00 : f32
    %148 = vector.broadcast %cst_65 : f32 to vector<4x256xf32>
    %149 = arith.subf %147, %148 : vector<4x256xf32>
    %150 = arith.mulf %139, %149 : vector<4x256xf32>
    %cst_66 = arith.constant 1.000000e+00 : f32
    %151 = vector.broadcast %cst_66 : f32 to vector<4x256xf32>
    %152 = arith.addf %147, %151 : vector<4x256xf32>
    %153 = tpu.reciprocal %152 {approx = true} : vector<4x256xf32> -> vector<4x256xf32>
    %154 = arith.mulf %150, %153 : vector<4x256xf32>
    %155 = vector.broadcast %0 : vector<4x1xf32> to vector<4x256xf32>
    %156 = arith.mulf %154, %155 : vector<4x256xf32>
    %c17_i32_67 = arith.constant 17 : i32
    %157 = tpu.dynamic_rotate %156 by %c17_i32_67 dim 1 : vector<4x256xf32>, i32 -> vector<4x256xf32>
    %158 = vector.extract_strided_slice %1 {offsets = [0, 0], sizes = [1, 256], strides = [1, 1]} : vector<8x256xf32> to vector<1x256xf32>
    %159 = vector.broadcast %158 : vector<1x256xf32> to vector<4x256xf32>
    %160 = arith.mulf %157, %159 : vector<4x256xf32>
    %161 = arith.truncf %160 : vector<4x256xf32> to vector<4x256xbf16>
    %c0_68 = arith.constant 0 : index
    %c0_69 = arith.constant 0 : index
    %162 = vector.load %arg21[%c0_68, %c0_69] : memref<72x256xbf16, #tpu.memory_space<vmem>>, vector<4x256xbf16>
    tpu.vector_store %arg21[%c0_68, %c0_69], %161 {strides = array<i32>} : memref<72x256xbf16, #tpu.memory_space<vmem>>, vector<4x256xbf16>,
    %c16_i32_70 = arith.constant 16 : i32
    %163 = tpu.dynamic_rotate %156 by %c16_i32_70 dim 1 : vector<4x256xf32>, i32 -> vector<4x256xf32>
    %164 = vector.extract_strided_slice %1 {offsets = [1, 0], sizes = [1, 256], strides = [1, 1]} : vector<8x256xf32> to vector<1x256xf32>
    %165 = vector.broadcast %164 : vector<1x256xf32> to vector<4x256xf32>
    %166 = arith.mulf %163, %165 : vector<4x256xf32>
    %167 = arith.truncf %166 : vector<4x256xf32> to vector<4x256xbf16>
    %c8_71 = arith.constant 8 : index
    %c0_72 = arith.constant 0 : index
    %168 = vector.load %arg21[%c8_71, %c0_72] : memref<72x256xbf16, #tpu.memory_space<vmem>>, vector<4x256xbf16>
    tpu.vector_store %arg21[%c8_71, %c0_72], %167 {strides = array<i32>} : memref<72x256xbf16, #tpu.memory_space<vmem>>, vector<4x256xbf16>,
    %c15_i32_73 = arith.constant 15 : i32
    %169 = tpu.dynamic_rotate %156 by %c15_i32_73 dim 1 : vector<4x256xf32>, i32 -> vector<4x256xf32>
    %170 = vector.extract_strided_slice %1 {offsets = [2, 0], sizes = [1, 256], strides = [1, 1]} : vector<8x256xf32> to vector<1x256xf32>
    %171 = vector.broadcast %170 : vector<1x256xf32> to vector<4x256xf32>
    %172 = arith.mulf %169, %171 : vector<4x256xf32>
    %173 = arith.truncf %172 : vector<4x256xf32> to vector<4x256xbf16>
    %c16_74 = arith.constant 16 : index
    %c0_75 = arith.constant 0 : index
    %174 = vector.load %arg21[%c16_74, %c0_75] : memref<72x256xbf16, #tpu.memory_space<vmem>>, vector<4x256xbf16>
    tpu.vector_store %arg21[%c16_74, %c0_75], %173 {strides = array<i32>} : memref<72x256xbf16, #tpu.memory_space<vmem>>, vector<4x256xbf16>,
    %c1_i32_76 = arith.constant 1 : i32
    %175 = tpu.dynamic_rotate %156 by %c1_i32_76 dim 1 : vector<4x256xf32>, i32 -> vector<4x256xf32>
    %176 = vector.extract_strided_slice %1 {offsets = [3, 0], sizes = [1, 256], strides = [1, 1]} : vector<8x256xf32> to vector<1x256xf32>
    %177 = vector.broadcast %176 : vector<1x256xf32> to vector<4x256xf32>
    %178 = arith.mulf %175, %177 : vector<4x256xf32>
    %179 = arith.truncf %178 : vector<4x256xf32> to vector<4x256xbf16>
    %c24_77 = arith.constant 24 : index
    %c0_78 = arith.constant 0 : index
    %180 = vector.load %arg21[%c24_77, %c0_78] : memref<72x256xbf16, #tpu.memory_space<vmem>>, vector<4x256xbf16>
    tpu.vector_store %arg21[%c24_77, %c0_78], %179 {strides = array<i32>} : memref<72x256xbf16, #tpu.memory_space<vmem>>, vector<4x256xbf16>,
    %181 = arith.truncf %156 : vector<4x256xf32> to vector<4x256xbf16>
    %c32_79 = arith.constant 32 : index
    %c0_80 = arith.constant 0 : index
    %182 = vector.load %arg21[%c32_79, %c0_80] : memref<72x256xbf16, #tpu.memory_space<vmem>>, vector<4x256xbf16>
    tpu.vector_store %arg21[%c32_79, %c0_80], %181 {strides = array<i32>} : memref<72x256xbf16, #tpu.memory_space<vmem>>, vector<4x256xbf16>,
    %c255_i32_81 = arith.constant 255 : i32
    %183 = tpu.dynamic_rotate %156 by %c255_i32_81 dim 1 : vector<4x256xf32>, i32 -> vector<4x256xf32>
    %184 = vector.extract_strided_slice %1 {offsets = [4, 0], sizes = [1, 256], strides = [1, 1]} : vector<8x256xf32> to vector<1x256xf32>
    %185 = vector.broadcast %184 : vector<1x256xf32> to vector<4x256xf32>
    %186 = arith.mulf %183, %185 : vector<4x256xf32>
    %187 = arith.truncf %186 : vector<4x256xf32> to vector<4x256xbf16>
    %c40_82 = arith.constant 40 : index
    %c0_83 = arith.constant 0 : index
    %188 = vector.load %arg21[%c40_82, %c0_83] : memref<72x256xbf16, #tpu.memory_space<vmem>>, vector<4x256xbf16>
    tpu.vector_store %arg21[%c40_82, %c0_83], %187 {strides = array<i32>} : memref<72x256xbf16, #tpu.memory_space<vmem>>, vector<4x256xbf16>,
    %c241_i32_84 = arith.constant 241 : i32
    %189 = tpu.dynamic_rotate %156 by %c241_i32_84 dim 1 : vector<4x256xf32>, i32 -> vector<4x256xf32>
    %190 = vector.extract_strided_slice %1 {offsets = [5, 0], sizes = [1, 256], strides = [1, 1]} : vector<8x256xf32> to vector<1x256xf32>
    %191 = vector.broadcast %190 : vector<1x256xf32> to vector<4x256xf32>
    %192 = arith.mulf %189, %191 : vector<4x256xf32>
    %193 = arith.truncf %192 : vector<4x256xf32> to vector<4x256xbf16>
    %c48_85 = arith.constant 48 : index
    %c0_86 = arith.constant 0 : index
    %194 = vector.load %arg21[%c48_85, %c0_86] : memref<72x256xbf16, #tpu.memory_space<vmem>>, vector<4x256xbf16>
    tpu.vector_store %arg21[%c48_85, %c0_86], %193 {strides = array<i32>} : memref<72x256xbf16, #tpu.memory_space<vmem>>, vector<4x256xbf16>,
    %c240_i32_87 = arith.constant 240 : i32
    %195 = tpu.dynamic_rotate %156 by %c240_i32_87 dim 1 : vector<4x256xf32>, i32 -> vector<4x256xf32>
    %196 = vector.extract_strided_slice %1 {offsets = [6, 0], sizes = [1, 256], strides = [1, 1]} : vector<8x256xf32> to vector<1x256xf32>
    %197 = vector.broadcast %196 : vector<1x256xf32> to vector<4x256xf32>
    %198 = arith.mulf %195, %197 : vector<4x256xf32>
    %199 = arith.truncf %198 : vector<4x256xf32> to vector<4x256xbf16>
    %c56_88 = arith.constant 56 : index
    %c0_89 = arith.constant 0 : index
    %200 = vector.load %arg21[%c56_88, %c0_89] : memref<72x256xbf16, #tpu.memory_space<vmem>>, vector<4x256xbf16>
    tpu.vector_store %arg21[%c56_88, %c0_89], %199 {strides = array<i32>} : memref<72x256xbf16, #tpu.memory_space<vmem>>, vector<4x256xbf16>,
    %c239_i32_90 = arith.constant 239 : i32
    %201 = tpu.dynamic_rotate %156 by %c239_i32_90 dim 1 : vector<4x256xf32>, i32 -> vector<4x256xf32>
    %202 = vector.extract_strided_slice %1 {offsets = [7, 0], sizes = [1, 256], strides = [1, 1]} : vector<8x256xf32> to vector<1x256xf32>
    %203 = vector.broadcast %202 : vector<1x256xf32> to vector<4x256xf32>
    %204 = arith.mulf %201, %203 : vector<4x256xf32>
    %205 = arith.truncf %204 : vector<4x256xf32> to vector<4x256xbf16>
    %c64_91 = arith.constant 64 : index
    %c0_92 = arith.constant 0 : index
    %206 = vector.load %arg21[%c64_91, %c0_92] : memref<72x256xbf16, #tpu.memory_space<vmem>>, vector<4x256xbf16>
    tpu.vector_store %arg21[%c64_91, %c0_92], %205 {strides = array<i32>} : memref<72x256xbf16, #tpu.memory_space<vmem>>, vector<4x256xbf16>,
    %c0_93 = arith.constant 0 : index
    %c0_94 = arith.constant 0 : index
    %207 = vector.load %arg14[%c0_93, %c0_94] : memref<4x72xbf16, #tpu.memory_space<vmem>>, vector<4x72xbf16>
    %c0_95 = arith.constant 0 : index
    %c0_96 = arith.constant 0 : index
    %208 = vector.load %arg21[%c0_95, %c0_96] : memref<72x256xbf16, #tpu.memory_space<vmem>>, vector<72x256xbf16>
    %cst_97 = arith.constant dense<0.000000e+00> : vector<4x256xf32>
    %209 = tpu.matmul %207, %208, %cst_97 {dimension_numbers = #tpu.dot_dimension_numbers<[1], [0], [0], [1], [0, 0, 1, 1], [], []>} : vector<4x72xbf16>, vector<72x256xbf16>, vector<4x256xf32> -> vector<4x256xf32>
    %c0_98 = arith.constant 0 : index
    %c0_99 = arith.constant 0 : index
    %210 = vector.load %arg15[%c0_98, %c0_99] : memref<4x1xf32, #tpu.memory_space<vmem>>, vector<4x1xf32>
    %211 = vector.broadcast %210 : vector<4x1xf32> to vector<4x256xf32>
    %212 = arith.addf %209, %211 : vector<4x256xf32>
    %cst_100 = arith.constant 2.000000e+01 : f32
    %213 = vector.broadcast %cst_100 : f32 to vector<4x256xf32>
    %214 = arith.minimumf %212, %213 : vector<4x256xf32>
    %215 = math.exp %214 : vector<4x256xf32>
    %cst_101 = arith.constant 1.000000e+00 : f32
    %216 = vector.broadcast %cst_101 : f32 to vector<4x256xf32>
    %217 = arith.addf %216, %215 : vector<4x256xf32>
    %cst_102 = arith.constant 1.000000e+00 : f32
    %218 = vector.broadcast %cst_102 : f32 to vector<4x256xf32>
    %219 = arith.addf %218, %215 : vector<4x256xf32>
    %220 = arith.mulf %217, %219 : vector<4x256xf32>
    %cst_103 = arith.constant 1.000000e+00 : f32
    %221 = vector.broadcast %cst_103 : f32 to vector<4x256xf32>
    %222 = arith.subf %220, %221 : vector<4x256xf32>
    %223 = arith.mulf %212, %222 : vector<4x256xf32>
    %cst_104 = arith.constant 1.000000e+00 : f32
    %224 = vector.broadcast %cst_104 : f32 to vector<4x256xf32>
    %225 = arith.addf %220, %224 : vector<4x256xf32>
    %226 = tpu.reciprocal %225 {approx = true} : vector<4x256xf32> -> vector<4x256xf32>
    %227 = arith.mulf %223, %226 : vector<4x256xf32>
    %228 = vector.broadcast %0 : vector<4x1xf32> to vector<4x256xf32>
    %229 = arith.mulf %227, %228 : vector<4x256xf32>
    %c2 = arith.constant 2 : index
    %c0_105 = arith.constant 0 : index
    %c0_106 = arith.constant 0 : index
    %230 = vector.load %arg4[%c2, %c0_105, %c0_106] : memref<3x4x1xf32, #tpu.memory_space<vmem>>, vector<1x4x1xf32>
    %231 = vector.shape_cast %230 : vector<1x4x1xf32> to vector<4x1xf32>
    %232 = vector.broadcast %231 : vector<4x1xf32> to vector<4x256xf32>
    %233 = arith.mulf %232, %229 : vector<4x256xf32>
    %234 = arith.addf %134, %233 : vector<4x256xf32>
    %c0_107 = arith.constant 0 : index
    %c0_108 = arith.constant 0 : index
    %235 = vector.load %arg16[%c0_107, %c0_108] : memref<4x1xf32, #tpu.memory_space<vmem>>, vector<4x1xf32>
    %236 = vector.broadcast %235 : vector<4x1xf32> to vector<4x256xf32>
    %237 = arith.addf %234, %236 : vector<4x256xf32>
    %cst_109 = arith.constant 2.000000e+01 : f32
    %238 = vector.broadcast %cst_109 : f32 to vector<4x256xf32>
    %239 = arith.minimumf %237, %238 : vector<4x256xf32>
    %240 = math.exp %239 : vector<4x256xf32>
    %cst_110 = arith.constant 1.000000e+00 : f32
    %241 = vector.broadcast %cst_110 : f32 to vector<4x256xf32>
    %242 = arith.addf %241, %240 : vector<4x256xf32>
    %cst_111 = arith.constant 1.000000e+00 : f32
    %243 = vector.broadcast %cst_111 : f32 to vector<4x256xf32>
    %244 = arith.addf %243, %240 : vector<4x256xf32>
    %245 = arith.mulf %242, %244 : vector<4x256xf32>
    %cst_112 = arith.constant 1.000000e+00 : f32
    %246 = vector.broadcast %cst_112 : f32 to vector<4x256xf32>
    %247 = arith.subf %245, %246 : vector<4x256xf32>
    %248 = arith.mulf %237, %247 : vector<4x256xf32>
    %cst_113 = arith.constant 1.000000e+00 : f32
    %249 = vector.broadcast %cst_113 : f32 to vector<4x256xf32>
    %250 = arith.addf %245, %249 : vector<4x256xf32>
    %251 = tpu.reciprocal %250 {approx = true} : vector<4x256xf32> -> vector<4x256xf32>
    %252 = arith.mulf %248, %251 : vector<4x256xf32>
    %253 = arith.truncf %252 : vector<4x256xf32> to vector<4x256xbf16>
    %c0_114 = arith.constant 0 : index
    %c0_115 = arith.constant 0 : index
    %254 = vector.load %arg21[%c0_114, %c0_115] : memref<72x256xbf16, #tpu.memory_space<vmem>>, vector<4x256xbf16>
    tpu.vector_store %arg21[%c0_114, %c0_115], %253 {strides = array<i32>} : memref<72x256xbf16, #tpu.memory_space<vmem>>, vector<4x256xbf16>,
    %c0_116 = arith.constant 0 : index
    %c0_117 = arith.constant 0 : index
    %255 = vector.load %arg17[%c0_116, %c0_117] : memref<4x1xf32, #tpu.memory_space<vmem>>, vector<4x1xf32>
    %256 = vector.broadcast %255 : vector<4x1xf32> to vector<4x256xf32>
    %257 = arith.addf %29, %256 : vector<4x256xf32>
    %cst_118 = arith.constant 2.000000e+01 : f32
    %258 = vector.broadcast %cst_118 : f32 to vector<4x256xf32>
    %259 = arith.minimumf %257, %258 : vector<4x256xf32>
    %260 = math.exp %259 : vector<4x256xf32>
    %cst_119 = arith.constant 1.000000e+00 : f32
    %261 = vector.broadcast %cst_119 : f32 to vector<4x256xf32>
    %262 = arith.addf %261, %260 : vector<4x256xf32>
    %cst_120 = arith.constant 1.000000e+00 : f32
    %263 = vector.broadcast %cst_120 : f32 to vector<4x256xf32>
    %264 = arith.addf %263, %260 : vector<4x256xf32>
    %265 = arith.mulf %262, %264 : vector<4x256xf32>
    %cst_121 = arith.constant 1.000000e+00 : f32
    %266 = vector.broadcast %cst_121 : f32 to vector<4x256xf32>
    %267 = arith.subf %265, %266 : vector<4x256xf32>
    %268 = arith.mulf %257, %267 : vector<4x256xf32>
    %cst_122 = arith.constant 1.000000e+00 : f32
    %269 = vector.broadcast %cst_122 : f32 to vector<4x256xf32>
    %270 = arith.addf %265, %269 : vector<4x256xf32>
    %271 = tpu.reciprocal %270 {approx = true} : vector<4x256xf32> -> vector<4x256xf32>
    %272 = arith.mulf %268, %271 : vector<4x256xf32>
    %273 = arith.truncf %272 : vector<4x256xf32> to vector<4x256xbf16>
    %c8_123 = arith.constant 8 : index
    %c0_124 = arith.constant 0 : index
    %274 = vector.load %arg21[%c8_123, %c0_124] : memref<72x256xbf16, #tpu.memory_space<vmem>>, vector<4x256xbf16>
    tpu.vector_store %arg21[%c8_123, %c0_124], %273 {strides = array<i32>} : memref<72x256xbf16, #tpu.memory_space<vmem>>, vector<4x256xbf16>,
    %c0_125 = arith.constant 0 : index
    %c0_126 = arith.constant 0 : index
    %275 = vector.load %arg18[%c0_125, %c0_126] : memref<4x16xbf16, #tpu.memory_space<vmem>>, vector<4x16xbf16>
    %c0_127 = arith.constant 0 : index
    %c0_128 = arith.constant 0 : index
    %276 = vector.load %arg21[%c0_127, %c0_128] : memref<72x256xbf16, #tpu.memory_space<vmem>>, vector<16x256xbf16>
    %cst_129 = arith.constant dense<0.000000e+00> : vector<4x256xf32>
    %277 = tpu.matmul %275, %276, %cst_129 {dimension_numbers = #tpu.dot_dimension_numbers<[1], [0], [0], [1], [0, 0, 1, 1], [], []>} : vector<4x16xbf16>, vector<16x256xbf16>, vector<4x256xf32> -> vector<4x256xf32>
    %c0_130 = arith.constant 0 : index
    %c0_131 = arith.constant 0 : index
    %278 = vector.load %arg19[%c0_130, %c0_131] : memref<4x1xf32, #tpu.memory_space<vmem>>, vector<4x1xf32>
    %279 = vector.broadcast %278 : vector<4x1xf32> to vector<4x256xf32>
    %280 = arith.addf %277, %279 : vector<4x256xf32>
    %cst_132 = arith.constant 2.000000e+01 : f32
    %281 = vector.broadcast %cst_132 : f32 to vector<4x256xf32>
    %282 = arith.minimumf %280, %281 : vector<4x256xf32>
    %283 = math.exp %282 : vector<4x256xf32>
    %cst_133 = arith.constant 1.000000e+00 : f32
    %284 = vector.broadcast %cst_133 : f32 to vector<4x256xf32>
    %285 = arith.addf %284, %283 : vector<4x256xf32>
    %cst_134 = arith.constant 1.000000e+00 : f32
    %286 = vector.broadcast %cst_134 : f32 to vector<4x256xf32>
    %287 = arith.addf %286, %283 : vector<4x256xf32>
    %288 = arith.mulf %285, %287 : vector<4x256xf32>
    %cst_135 = arith.constant 1.000000e+00 : f32
    %289 = vector.broadcast %cst_135 : f32 to vector<4x256xf32>
    %290 = arith.subf %288, %289 : vector<4x256xf32>
    %291 = arith.mulf %280, %290 : vector<4x256xf32>
    %cst_136 = arith.constant 1.000000e+00 : f32
    %292 = vector.broadcast %cst_136 : f32 to vector<4x256xf32>
    %293 = arith.addf %288, %292 : vector<4x256xf32>
    %294 = tpu.reciprocal %293 {approx = true} : vector<4x256xf32> -> vector<4x256xf32>
    %295 = arith.mulf %291, %294 : vector<4x256xf32>
    %296 = arith.truncf %295 : vector<4x256xf32> to vector<4x256xbf16>
    %c0_137 = arith.constant 0 : index
    %c0_138 = arith.constant 0 : index
    %297 = vector.load %arg20[%c0_137, %c0_138] : memref<4x256xbf16, #tpu.memory_space<vmem>>, vector<4x256xbf16>
    tpu.vector_store %arg20[%c0_137, %c0_138], %296 {strides = array<i32>} : memref<4x256xbf16, #tpu.memory_space<vmem>>, vector<4x256xbf16>,
    return
  }
  func.func @transform_0(%arg0: i32) -> (i32, i32) {
    %c0_i32 = arith.constant 0 : i32
    %c0_i32_0 = arith.constant 0 : i32
    return %c0_i32, %arg0 : i32, i32
  }
  func.func @transform_1(%arg0: i32) -> (i32, i32) {
    %c0_i32 = arith.constant 0 : i32
    %c0_i32_0 = arith.constant 0 : i32
    %c0_i32_1 = arith.constant 0 : i32
    return %c0_i32, %c0_i32_0 : i32, i32
  }
  func.func @transform_2(%arg0: i32) -> (i32, i32) {
    %c0_i32 = arith.constant 0 : i32
    %c0_i32_0 = arith.constant 0 : i32
    %c0_i32_1 = arith.constant 0 : i32
    return %c0_i32, %c0_i32_0 : i32, i32
  }
  func.func @transform_3(%arg0: i32) -> (i32, i32, i32) {
    %c0_i32 = arith.constant 0 : i32
    %c0_i32_0 = arith.constant 0 : i32
    %c0_i32_1 = arith.constant 0 : i32
    %c0_i32_2 = arith.constant 0 : i32
    return %c0_i32, %c0_i32_0, %c0_i32_1 : i32, i32, i32
  }
  func.func @transform_4(%arg0: i32) -> (i32, i32) {
    %c0_i32 = arith.constant 0 : i32
    %c0_i32_0 = arith.constant 0 : i32
    %c0_i32_1 = arith.constant 0 : i32
    return %c0_i32, %c0_i32_0 : i32, i32
  }
  func.func @transform_5(%arg0: i32) -> (i32, i32) {
    %c0_i32 = arith.constant 0 : i32
    %c0_i32_0 = arith.constant 0 : i32
    %c0_i32_1 = arith.constant 0 : i32
    return %c0_i32, %c0_i32_0 : i32, i32
  }
  func.func @transform_6(%arg0: i32) -> (i32, i32) {
    %c0_i32 = arith.constant 0 : i32
    %c0_i32_0 = arith.constant 0 : i32
    %c0_i32_1 = arith.constant 0 : i32
    return %c0_i32, %c0_i32_0 : i32, i32
  }
  func.func @transform_7(%arg0: i32) -> (i32, i32) {
    %c0_i32 = arith.constant 0 : i32
    %c0_i32_0 = arith.constant 0 : i32
    %c0_i32_1 = arith.constant 0 : i32
    return %c0_i32, %c0_i32_0 : i32, i32
  }
  func.func @transform_8(%arg0: i32) -> (i32, i32) {
    %c0_i32 = arith.constant 0 : i32
    %c0_i32_0 = arith.constant 0 : i32
    %c0_i32_1 = arith.constant 0 : i32
    return %c0_i32, %c0_i32_0 : i32, i32
  }
  func.func @transform_9(%arg0: i32) -> (i32, i32) {
    %c0_i32 = arith.constant 0 : i32
    %c0_i32_0 = arith.constant 0 : i32
    %c0_i32_1 = arith.constant 0 : i32
    return %c0_i32, %c0_i32_0 : i32, i32
  }
  func.func @transform_10(%arg0: i32) -> (i32, i32) {
    %c0_i32 = arith.constant 0 : i32
    %c0_i32_0 = arith.constant 0 : i32
    %c0_i32_1 = arith.constant 0 : i32
    return %c0_i32, %c0_i32_0 : i32, i32
  }
  func.func @transform_11(%arg0: i32) -> (i32, i32) {
    %c0_i32 = arith.constant 0 : i32
    %c0_i32_0 = arith.constant 0 : i32
    %c0_i32_1 = arith.constant 0 : i32
    return %c0_i32, %c0_i32_0 : i32, i32
  }
  func.func @transform_12(%arg0: i32) -> (i32, i32) {
    %c0_i32 = arith.constant 0 : i32
    %c0_i32_0 = arith.constant 0 : i32
    %c0_i32_1 = arith.constant 0 : i32
    return %c0_i32, %c0_i32_0 : i32, i32
  }
  func.func @transform_13(%arg0: i32) -> (i32, i32) {
    %c0_i32 = arith.constant 0 : i32
    %c0_i32_0 = arith.constant 0 : i32
    %c0_i32_1 = arith.constant 0 : i32
    return %c0_i32, %c0_i32_0 : i32, i32
  }
  func.func @transform_14(%arg0: i32) -> (i32, i32) {
    %c0_i32 = arith.constant 0 : i32
    %c0_i32_0 = arith.constant 0 : i32
    %c0_i32_1 = arith.constant 0 : i32
    return %c0_i32, %c0_i32_0 : i32, i32
  }
  func.func @transform_15(%arg0: i32) -> (i32, i32) {
    %c0_i32 = arith.constant 0 : i32
    %c0_i32_0 = arith.constant 0 : i32
    %c0_i32_1 = arith.constant 0 : i32
    return %c0_i32, %c0_i32_0 : i32, i32
  }
  func.func @transform_16(%arg0: i32) -> (i32, i32) {
    %c0_i32 = arith.constant 0 : i32
    %c0_i32_0 = arith.constant 0 : i32
    %c0_i32_1 = arith.constant 0 : i32
    return %c0_i32, %c0_i32_0 : i32, i32
  }
  func.func @transform_17(%arg0: i32) -> (i32, i32) {
    %c0_i32 = arith.constant 0 : i32
    %c0_i32_0 = arith.constant 0 : i32
    %c0_i32_1 = arith.constant 0 : i32
    return %c0_i32, %c0_i32_0 : i32, i32
  }
  func.func @transform_18(%arg0: i32) -> (i32, i32) {
    %c0_i32 = arith.constant 0 : i32
    %c0_i32_0 = arith.constant 0 : i32
    %c0_i32_1 = arith.constant 0 : i32
    return %c0_i32, %c0_i32_0 : i32, i32
  }
  func.func @transform_19(%arg0: i32) -> (i32, i32) {
    %c0_i32 = arith.constant 0 : i32
    %c0_i32_0 = arith.constant 0 : i32
    return %c0_i32, %arg0 : i32, i32
  }
}

</mosaic_0001>

<llo_original>
// kernel: _lambda_.1
$region0: #{_lambda_.1}
  #allocation0 [shape = 'u32[]', space=smem, size = 0x4, offset = 0x4, fixed_abs, tag = 'smem constant byte address 0x4 - core index']
  #allocation1 [shape = 'u32[144,128]{1,0:T(1,128)}', space=vmem, size = 0x12000, scoped, tag = 'internal scratch']
  #allocation2 [shape = 'bf16[72,256]{1,0:T(8,128)(2,1)}', space=vmem, size = 0x9000, scoped, tag = 'scratch operand']
  %s0 = inlined_call_operand.vmem [shape: bf16[4,512], index: 0, kind: input, shape index: {}]
  %s1 = inlined_call_operand.vmem [shape: f32[8,256], index: 1, kind: input, shape index: {}]
  %s2 = inlined_call_operand.vmem [shape: f32[4,1], index: 2, kind: input, shape index: {}]
  %s3 = inlined_call_operand.vmem [shape: f32[3,4,1], index: 3, kind: input, shape index: {}]
  %s4 = inlined_call_operand.vmem [shape: bf16[4,4], index: 4, kind: input, shape index: {}]
  %s5 = inlined_call_operand.vmem [shape: f32[4,1], index: 5, kind: input, shape index: {}]
  %s6 = inlined_call_operand.vmem [shape: bf16[4,4], index: 6, kind: input, shape index: {}]
  %s7 = inlined_call_operand.vmem [shape: bf16[4,4], index: 7, kind: input, shape index: {}]
  %s8 = inlined_call_operand.vmem [shape: f32[4,1], index: 8, kind: input, shape index: {}]
  %s9 = inlined_call_operand.vmem [shape: bf16[4,72], index: 9, kind: input, shape index: {}]
  %s10 = inlined_call_operand.vmem [shape: f32[4,1], index: 10, kind: input, shape index: {}]
  %s11 = inlined_call_operand.vmem [shape: bf16[4,4], index: 11, kind: input, shape index: {}]
  %s12 = inlined_call_operand.vmem [shape: f32[4,1], index: 12, kind: input, shape index: {}]
  %s13 = inlined_call_operand.vmem [shape: bf16[4,72], index: 13, kind: input, shape index: {}]
  %s14 = inlined_call_operand.vmem [shape: f32[4,1], index: 14, kind: input, shape index: {}]
  %s15 = inlined_call_operand.vmem [shape: f32[4,1], index: 15, kind: input, shape index: {}]
  %s16 = inlined_call_operand.vmem [shape: f32[4,1], index: 16, kind: input, shape index: {}]
  %s17 = inlined_call_operand.vmem [shape: bf16[4,16], index: 17, kind: input, shape index: {}]
  %s18 = inlined_call_operand.vmem [shape: f32[4,1], index: 18, kind: input, shape index: {}]
  %s19 = inlined_call_operand.vmem [shape: bf16[4,512], index: 19, kind: output, shape index: {}]
  %s20 = sld [smem:[#allocation0]]
  $region109: #{_lambda_.1} parent=0
    _
  %s22 = ssub.s32 1, %s20
  %s23 = scalar_select 0, %s22, %s20
  loop: start=0, step=1, limit=4
  $region2: #{_lambda_.1} parent=0 // loop_pre_header
    _
  $region3: #{_lambda_.1} parent=0 // loop_header
    %s25 = sphi 0, %s29
    %p26 = scmp.ge.s32.totalorder %s25, 4
    %s35 = sphi 0, %s37
    %s38 = sphi 0, %s35
    %s39 = sphi 0, %s38
    %s55 = sphi 0, %s39
    %s59 = sphi 0, %s59
    %s61 = sphi 0, %s59
    %s62 = sphi 0, %s61
    %s76 = sphi 0, %s62
    %s80 = sphi 0, %s80
    %s82 = sphi 0, %s80
    %s83 = sphi 0, %s82
    %s97 = sphi 0, %s83
    %s101 = sphi 0, %s101
    %s103 = sphi 0, %s101
    %s104 = sphi 0, %s103
    %s118 = sphi 0, %s104
    %s122 = sphi 0, %s122
    %s124 = sphi 0, %s122
    %s125 = sphi 0, %s124
    %s139 = sphi 0, %s125
    %s143 = sphi 0, %s143
    %s145 = sphi 0, %s143
    %s146 = sphi 0, %s145
    %s160 = sphi 0, %s146
    %s164 = sphi 0, %s164
    %s166 = sphi 0, %s164
    %s167 = sphi 0, %s166
    %s181 = sphi 0, %s167
    %s185 = sphi 0, %s185
    %s187 = sphi 0, %s185
    %s188 = sphi 0, %s187
    %s202 = sphi 0, %s188
    %s206 = sphi 0, %s206
    %s208 = sphi 0, %s206
    %s209 = sphi 0, %s208
    %s223 = sphi 0, %s209
    %s227 = sphi 0, %s227
    %s229 = sphi 0, %s227
    %s230 = sphi 0, %s229
    %s244 = sphi 0, %s230
    %s248 = sphi 0, %s248
    %s250 = sphi 0, %s248
    %s251 = sphi 0, %s250
    %s265 = sphi 0, %s251
    %s269 = sphi 0, %s269
    %s271 = sphi 0, %s269
    %s272 = sphi 0, %s271
    %s286 = sphi 0, %s272
    %s290 = sphi 0, %s290
    %s292 = sphi 0, %s290
    %s293 = sphi 0, %s292
    %s307 = sphi 0, %s293
    %s311 = sphi 0, %s311
    %s313 = sphi 0, %s311
    %s314 = sphi 0, %s313
    %s328 = sphi 0, %s314
    %s332 = sphi 0, %s332
    %s334 = sphi 0, %s332
    %s335 = sphi 0, %s334
    %s349 = sphi 0, %s335
    %s353 = sphi 0, %s353
    %s355 = sphi 0, %s353
    %s356 = sphi 0, %s355
    %s370 = sphi 0, %s356
    %s374 = sphi 0, %s374
    %s376 = sphi 0, %s374
    %s377 = sphi 0, %s376
    %s391 = sphi 0, %s377
    %s395 = sphi 0, %s395
    %s397 = sphi 0, %s395
    %s398 = sphi 0, %s397
    %s412 = sphi 0, %s398
    %s416 = sphi 0, %s416
    %s418 = sphi 0, %s416
    %s419 = sphi 0, %s418
    %s433 = sphi 0, %s419
    %s439 = sphi 0, %s441
    %s442 = sphi 0, %s439
    %s443 = sphi 0, %s442
    %s459 = sphi 0, %s443
  $region4: #{_lambda_.1} parent=0 // loop_header_branch
    %28 = sbr.rel (%p26) target = $region8
  $region5: #{_lambda_.1} parent=0 // loop_body
    %s30 = ssub.s32 %s25, 1
    %s31 = ssub.s32 %s25, 2
    %s32 = sadd.s32 %s25, 1
    %s33 = ssub.s32 %s25, %s32
    %p34 = scmp.eq.s32.totalorder %s33, 0
    %s36 = sadd.s32 %s35, 1
    %s37 = scalar_select %p34, %s35, %s36
    %p40 = pneg %p34
    %p41 = scmp.eq.s32.totalorder %s25, 1
    %p42 = por %p40, %p41
    %p43 = scmp.ne.s32.totalorder %s35, %s38
    %p44 = scmp.eq.s32.totalorder %s25, 0
    %p45 = por %p43, %p44
    %p46 = scmp.ne.s32.totalorder %s35, %s38
    %p47 = scmp.eq.s32.totalorder %s30, 1
    %p48 = por %p46, %p47
    %p49 = scmp.ne.s32.totalorder %s38, %s39
    %p50 = scmp.eq.s32.totalorder %s30, 0
    %p51 = por %p49, %p50
    %p52 = scmp.ne.s32.totalorder %s38, %s39
    %p53 = scmp.eq.s32.totalorder %s31, 1
    %p54 = por %p52, %p53
    %p56 = scmp.ne.s32.totalorder %s39, %s55
    %p57 = scmp.eq.s32.totalorder %s31, 0
    %p58 = por %p56, %p57
    %s60 = sadd.s32 %s59, 1
    %p63 = scmp.eq.s32.totalorder %s25, 1
    %p64 = scmp.ne.s32.totalorder %s59, %s61
    %p65 = scmp.eq.s32.totalorder %s25, 0
    %p66 = por %p64, %p65
    %p67 = scmp.ne.s32.totalorder %s59, %s61
    %p68 = scmp.eq.s32.totalorder %s30, 1
    %p69 = por %p67, %p68
    %p70 = scmp.ne.s32.totalorder %s61, %s62
    %p71 = scmp.eq.s32.totalorder %s30, 0
    %p72 = por %p70, %p71
    %p73 = scmp.ne.s32.totalorder %s61, %s62
    %p74 = scmp.eq.s32.totalorder %s31, 1
    %p75 = por %p73, %p74
    %p77 = scmp.ne.s32.totalorder %s62, %s76
    %p78 = scmp.eq.s32.totalorder %s31, 0
    %p79 = por %p77, %p78
    %s81 = sadd.s32 %s80, 1
    %p84 = scmp.eq.s32.totalorder %s25, 1
    %p85 = scmp.ne.s32.totalorder %s80, %s82
    %p86 = scmp.eq.s32.totalorder %s25, 0
    %p87 = por %p85, %p86
    %p88 = scmp.ne.s32.totalorder %s80, %s82
    %p89 = scmp.eq.s32.totalorder %s30, 1
    %p90 = por %p88, %p89
    %p91 = scmp.ne.s32.totalorder %s82, %s83
    %p92 = scmp.eq.s32.totalorder %s30, 0
    %p93 = por %p91, %p92
    %p94 = scmp.ne.s32.totalorder %s82, %s83
    %p95 = scmp.eq.s32.totalorder %s31, 1
    %p96 = por %p94, %p95
    %p98 = scmp.ne.s32.totalorder %s83, %s97
    %p99 = scmp.eq.s32.totalorder %s31, 0
    %p100 = por %p98, %p99
    %s102 = sadd.s32 %s101, 1
    %p105 = scmp.eq.s32.totalorder %s25, 1
    %p106 = scmp.ne.s32.totalorder %s101, %s103
    %p107 = scmp.eq.s32.totalorder %s25, 0
    %p108 = por %p106, %p107
    %p109 = scmp.ne.s32.totalorder %s101, %s103
    %p110 = scmp.eq.s32.totalorder %s30, 1
    %p111 = por %p109, %p110
    %p112 = scmp.ne.s32.totalorder %s103, %s104
    %p113 = scmp.eq.s32.totalorder %s30, 0
    %p114 = por %p112, %p113
    %p115 = scmp.ne.s32.totalorder %s103, %s104
    %p116 = scmp.eq.s32.totalorder %s31, 1
    %p117 = por %p115, %p116
    %p119 = scmp.ne.s32.totalorder %s104, %s118
    %p120 = scmp.eq.s32.totalorder %s31, 0
    %p121 = por %p119, %p120
    %s123 = sadd.s32 %s122, 1
    %p126 = scmp.eq.s32.totalorder %s25, 1
    %p127 = scmp.ne.s32.totalorder %s122, %s124
    %p128 = scmp.eq.s32.totalorder %s25, 0
    %p129 = por %p127, %p128
    %p130 = scmp.ne.s32.totalorder %s122, %s124
    %p131 = scmp.eq.s32.totalorder %s30, 1
    %p132 = por %p130, %p131
    %p133 = scmp.ne.s32.totalorder %s124, %s125
    %p134 = scmp.eq.s32.totalorder %s30, 0
    %p135 = por %p133, %p134
    %p136 = scmp.ne.s32.totalorder %s124, %s125
    %p137 = scmp.eq.s32.totalorder %s31, 1
    %p138 = por %p136, %p137
    %p140 = scmp.ne.s32.totalorder %s125, %s139
    %p141 = scmp.eq.s32.totalorder %s31, 0
    %p142 = por %p140, %p141
    %s144 = sadd.s32 %s143, 1
    %p147 = scmp.eq.s32.totalorder %s25, 1
    %p148 = scmp.ne.s32.totalorder %s143, %s145
    %p149 = scmp.eq.s32.totalorder %s25, 0
    %p150 = por %p148, %p149
    %p151 = scmp.ne.s32.totalorder %s143, %s145
    %p152 = scmp.eq.s32.totalorder %s30, 1
    %p153 = por %p151, %p152
    %p154 = scmp.ne.s32.totalorder %s145, %s146
    %p155 = scmp.eq.s32.totalorder %s30, 0
    %p156 = por %p154, %p155
    %p157 = scmp.ne.s32.totalorder %s145, %s146
    %p158 = scmp.eq.s32.totalorder %s31, 1
    %p159 = por %p157, %p158
    %p161 = scmp.ne.s32.totalorder %s146, %s160
    %p162 = scmp.eq.s32.totalorder %s31, 0
    %p163 = por %p161, %p162
    %s165 = sadd.s32 %s164, 1
    %p168 = scmp.eq.s32.totalorder %s25, 1
    %p169 = scmp.ne.s32.totalorder %s164, %s166
    %p170 = scmp.eq.s32.totalorder %s25, 0
    %p171 = por %p169, %p170
    %p172 = scmp.ne.s32.totalorder %s164, %s166
    %p173 = scmp.eq.s32.totalorder %s30, 1
    %p174 = por %p172, %p173
    %p175 = scmp.ne.s32.totalorder %s166, %s167
    %p176 = scmp.eq.s32.totalorder %s30, 0
    %p177 = por %p175, %p176
    %p178 = scmp.ne.s32.totalorder %s166, %s167
    %p179 = scmp.eq.s32.totalorder %s31, 1
    %p180 = por %p178, %p179
    %p182 = scmp.ne.s32.totalorder %s167, %s181
    %p183 = scmp.eq.s32.totalorder %s31, 0
    %p184 = por %p182, %p183
    %s186 = sadd.s32 %s185, 1
    %p189 = scmp.eq.s32.totalorder %s25, 1
    %p190 = scmp.ne.s32.totalorder %s185, %s187
    %p191 = scmp.eq.s32.totalorder %s25, 0
    %p192 = por %p190, %p191
    %p193 = scmp.ne.s32.totalorder %s185, %s187
    %p194 = scmp.eq.s32.totalorder %s30, 1
    %p195 = por %p193, %p194
    %p196 = scmp.ne.s32.totalorder %s187, %s188
    %p197 = scmp.eq.s32.totalorder %s30, 0
    %p198 = por %p196, %p197
    %p199 = scmp.ne.s32.totalorder %s187, %s188
    %p200 = scmp.eq.s32.totalorder %s31, 1
    %p201 = por %p199, %p200
    %p203 = scmp.ne.s32.totalorder %s188, %s202
    %p204 = scmp.eq.s32.totalorder %s31, 0
    %p205 = por %p203, %p204
    %s207 = sadd.s32 %s206, 1
    %p210 = scmp.eq.s32.totalorder %s25, 1
    %p211 = scmp.ne.s32.totalorder %s206, %s208
    %p212 = scmp.eq.s32.totalorder %s25, 0
    %p213 = por %p211, %p212
    %p214 = scmp.ne.s32.totalorder %s206, %s208
    %p215 = scmp.eq.s32.totalorder %s30, 1
    %p216 = por %p214, %p215
    %p217 = scmp.ne.s32.totalorder %s208, %s209
    %p218 = scmp.eq.s32.totalorder %s30, 0
    %p219 = por %p217, %p218
    %p220 = scmp.ne.s32.totalorder %s208, %s209
    %p221 = scmp.eq.s32.totalorder %s31, 1
    %p222 = por %p220, %p221
    %p224 = scmp.ne.s32.totalorder %s209, %s223
    %p225 = scmp.eq.s32.totalorder %s31, 0
    %p226 = por %p224, %p225
    %s228 = sadd.s32 %s227, 1
    %p231 = scmp.eq.s32.totalorder %s25, 1
    %p232 = scmp.ne.s32.totalorder %s227, %s229
    %p233 = scmp.eq.s32.totalorder %s25, 0
    %p234 = por %p232, %p233
    %p235 = scmp.ne.s32.totalorder %s227, %s229
    %p236 = scmp.eq.s32.totalorder %s30, 1
    %p237 = por %p235, %p236
    %p238 = scmp.ne.s32.totalorder %s229, %s230
    %p239 = scmp.eq.s32.totalorder %s30, 0
    %p240 = por %p238, %p239
    %p241 = scmp.ne.s32.totalorder %s229, %s230
    %p242 = scmp.eq.s32.totalorder %s31, 1
    %p243 = por %p241, %p242
    %p245 = scmp.ne.s32.totalorder %s230, %s244
    %p246 = scmp.eq.s32.totalorder %s31, 0
    %p247 = por %p245, %p246
    %s249 = sadd.s32 %s248, 1
    %p252 = scmp.eq.s32.totalorder %s25, 1
    %p253 = scmp.ne.s32.totalorder %s248, %s250
    %p254 = scmp.eq.s32.totalorder %s25, 0
    %p255 = por %p253, %p254
    %p256 = scmp.ne.s32.totalorder %s248, %s250
    %p257 = scmp.eq.s32.totalorder %s30, 1
    %p258 = por %p256, %p257
    %p259 = scmp.ne.s32.totalorder %s250, %s251
    %p260 = scmp.eq.s32.totalorder %s30, 0
    %p261 = por %p259, %p260
    %p262 = scmp.ne.s32.totalorder %s250, %s251
    %p263 = scmp.eq.s32.totalorder %s31, 1
    %p264 = por %p262, %p263
    %p266 = scmp.ne.s32.totalorder %s251, %s265
    %p267 = scmp.eq.s32.totalorder %s31, 0
    %p268 = por %p266, %p267
    %s270 = sadd.s32 %s269, 1
    %p273 = scmp.eq.s32.totalorder %s25, 1
    %p274 = scmp.ne.s32.totalorder %s269, %s271
    %p275 = scmp.eq.s32.totalorder %s25, 0
    %p276 = por %p274, %p275
    %p277 = scmp.ne.s32.totalorder %s269, %s271
    %p278 = scmp.eq.s32.totalorder %s30, 1
    %p279 = por %p277, %p278
    %p280 = scmp.ne.s32.totalorder %s271, %s272
    %p281 = scmp.eq.s32.totalorder %s30, 0
    %p282 = por %p280, %p281
    %p283 = scmp.ne.s32.totalorder %s271, %s272
    %p284 = scmp.eq.s32.totalorder %s31, 1
    %p285 = por %p283, %p284
    %p287 = scmp.ne.s32.totalorder %s272, %s286
    %p288 = scmp.eq.s32.totalorder %s31, 0
    %p289 = por %p287, %p288
    %s291 = sadd.s32 %s290, 1
    %p294 = scmp.eq.s32.totalorder %s25, 1
    %p295 = scmp.ne.s32.totalorder %s290, %s292
    %p296 = scmp.eq.s32.totalorder %s25, 0
    %p297 = por %p295, %p296
    %p298 = scmp.ne.s32.totalorder %s290, %s292
    %p299 = scmp.eq.s32.totalorder %s30, 1
    %p300 = por %p298, %p299
    %p301 = scmp.ne.s32.totalorder %s292, %s293
    %p302 = scmp.eq.s32.totalorder %s30, 0
    %p303 = por %p301, %p302
    %p304 = scmp.ne.s32.totalorder %s292, %s293
    %p305 = scmp.eq.s32.totalorder %s31, 1
    %p306 = por %p304, %p305
    %p308 = scmp.ne.s32.totalorder %s293, %s307
    %p309 = scmp.eq.s32.totalorder %s31, 0
    %p310 = por %p308, %p309
    %s312 = sadd.s32 %s311, 1
    %p315 = scmp.eq.s32.totalorder %s25, 1
    %p316 = scmp.ne.s32.totalorder %s311, %s313
    %p317 = scmp.eq.s32.totalorder %s25, 0
    %p318 = por %p316, %p317
    %p319 = scmp.ne.s32.totalorder %s311, %s313
    %p320 = scmp.eq.s32.totalorder %s30, 1
    %p321 = por %p319, %p320
    %p322 = scmp.ne.s32.totalorder %s313, %s314
    %p323 = scmp.eq.s32.totalorder %s30, 0
    %p324 = por %p322, %p323
    %p325 = scmp.ne.s32.totalorder %s313, %s314
    %p326 = scmp.eq.s32.totalorder %s31, 1
    %p327 = por %p325, %p326
    %p329 = scmp.ne.s32.totalorder %s314, %s328
    %p330 = scmp.eq.s32.totalorder %s31, 0
    %p331 = por %p329, %p330
    %s333 = sadd.s32 %s332, 1
    %p336 = scmp.eq.s32.totalorder %s25, 1
    %p337 = scmp.ne.s32.totalorder %s332, %s334
    %p338 = scmp.eq.s32.totalorder %s25, 0
    %p339 = por %p337, %p338
    %p340 = scmp.ne.s32.totalorder %s332, %s334
    %p341 = scmp.eq.s32.totalorder %s30, 1
    %p342 = por %p340, %p341
    %p343 = scmp.ne.s32.totalorder %s334, %s335
    %p344 = scmp.eq.s32.totalorder %s30, 0
    %p345 = por %p343, %p344
    %p346 = scmp.ne.s32.totalorder %s334, %s335
    %p347 = scmp.eq.s32.totalorder %s31, 1
    %p348 = por %p346, %p347
    %p350 = scmp.ne.s32.totalorder %s335, %s349
    %p351 = scmp.eq.s32.totalorder %s31, 0
    %p352 = por %p350, %p351
    %s354 = sadd.s32 %s353, 1
    %p357 = scmp.eq.s32.totalorder %s25, 1
    %p358 = scmp.ne.s32.totalorder %s353, %s355
    %p359 = scmp.eq.s32.totalorder %s25, 0
    %p360 = por %p358, %p359
    %p361 = scmp.ne.s32.totalorder %s353, %s355
    %p362 = scmp.eq.s32.totalorder %s30, 1
    %p363 = por %p361, %p362
    %p364 = scmp.ne.s32.totalorder %s355, %s356
    %p365 = scmp.eq.s32.totalorder %s30, 0
    %p366 = por %p364, %p365
    %p367 = scmp.ne.s32.totalorder %s355, %s356
    %p368 = scmp.eq.s32.totalorder %s31, 1
    %p369 = por %p367, %p368
    %p371 = scmp.ne.s32.totalorder %s356, %s370
    %p372 = scmp.eq.s32.totalorder %s31, 0
    %p373 = por %p371, %p372
    %s375 = sadd.s32 %s374, 1
    %p378 = scmp.eq.s32.totalorder %s25, 1
    %p379 = scmp.ne.s32.totalorder %s374, %s376
    %p380 = scmp.eq.s32.totalorder %s25, 0
    %p381 = por %p379, %p380
    %p382 = scmp.ne.s32.totalorder %s374, %s376
    %p383 = scmp.eq.s32.totalorder %s30, 1
    %p384 = por %p382, %p383
    %p385 = scmp.ne.s32.totalorder %s376, %s377
    %p386 = scmp.eq.s32.totalorder %s30, 0
    %p387 = por %p385, %p386
    %p388 = scmp.ne.s32.totalorder %s376, %s377
    %p389 = scmp.eq.s32.totalorder %s31, 1
    %p390 = por %p388, %p389
    %p392 = scmp.ne.s32.totalorder %s377, %s391
    %p393 = scmp.eq.s32.totalorder %s31, 0
    %p394 = por %p392, %p393
    %s396 = sadd.s32 %s395, 1
    %p399 = scmp.eq.s32.totalorder %s25, 1
    %p400 = scmp.ne.s32.totalorder %s395, %s397
    %p401 = scmp.eq.s32.totalorder %s25, 0
    %p402 = por %p400, %p401
    %p403 = scmp.ne.s32.totalorder %s395, %s397
    %p404 = scmp.eq.s32.totalorder %s30, 1
    %p405 = por %p403, %p404
    %p406 = scmp.ne.s32.totalorder %s397, %s398
    %p407 = scmp.eq.s32.totalorder %s30, 0
    %p408 = por %p406, %p407
    %p409 = scmp.ne.s32.totalorder %s397, %s398
    %p410 = scmp.eq.s32.totalorder %s31, 1
    %p411 = por %p409, %p410
    %p413 = scmp.ne.s32.totalorder %s398, %s412
    %p414 = scmp.eq.s32.totalorder %s31, 0
    %p415 = por %p413, %p414
    %s417 = sadd.s32 %s416, 1
    %p420 = scmp.eq.s32.totalorder %s25, 1
    %p421 = scmp.ne.s32.totalorder %s416, %s418
    %p422 = scmp.eq.s32.totalorder %s25, 0
    %p423 = por %p421, %p422
    %p424 = scmp.ne.s32.totalorder %s416, %s418
    %p425 = scmp.eq.s32.totalorder %s30, 1
    %p426 = por %p424, %p425
    %p427 = scmp.ne.s32.totalorder %s418, %s419
    %p428 = scmp.eq.s32.totalorder %s30, 0
    %p429 = por %p427, %p428
    %p430 = scmp.ne.s32.totalorder %s418, %s419
    %p431 = scmp.eq.s32.totalorder %s31, 1
    %p432 = por %p430, %p431
    %p434 = scmp.ne.s32.totalorder %s419, %s433
    %p435 = scmp.eq.s32.totalorder %s31, 0
    %p436 = por %p434, %p435
    %s437 = ssub.s32 %s25, %s32
    %p438 = scmp.eq.s32.totalorder %s437, 0
    %s440 = sadd.s32 %s439, 1
    %s441 = scalar_select %p438, %s439, %s440
    %p444 = pneg %p438
    %p445 = scmp.eq.s32.totalorder %s25, 1
    %p446 = por %p444, %p445
    %p447 = scmp.ne.s32.totalorder %s439, %s442
    %p448 = scmp.eq.s32.totalorder %s25, 0
    %p449 = por %p447, %p448
    %p450 = scmp.ne.s32.totalorder %s439, %s442
    %p451 = scmp.eq.s32.totalorder %s30, 1
    %p452 = por %p450, %p451
    %p453 = scmp.ne.s32.totalorder %s442, %s443
    %p454 = scmp.eq.s32.totalorder %s30, 0
    %p455 = por %p453, %p454
    %p456 = scmp.ne.s32.totalorder %s442, %s443
    %p457 = scmp.eq.s32.totalorder %s31, 1
    %p458 = por %p456, %p457
    %p460 = scmp.ne.s32.totalorder %s443, %s459
    %p461 = scmp.eq.s32.totalorder %s31, 0
    %p462 = por %p460, %p461
    %p463 = scmp.le.s32.totalorder 1, %s25
    %p464 = scmp.lt.s32.totalorder %s25, 3
    %p465 = pnand %p463, %p464
    %p466 = pneg %p465
    // Predicated region
    $region9: #{_lambda_.1} parent=5 // pred_check
      _
    $region10: #{_lambda_.1} parent=5 // pred_check_branch
      %468 = sbr.rel (%p465) target = $region12
    $region11: #{_lambda_.1} parent=5 // pred_region
      %s469 = ssub.s32 %s25, 1
      // Predicated region
      $region13: #{_lambda_.1} parent=11 // pred_check
        %p470 = pneg %p72
      $region14: #{_lambda_.1} parent=11 // pred_check_branch
        %472 = sbr.rel (%p470) target = $region16
      $region15: #{_lambda_.1} parent=11 // pred_region
        _
      $region16: #{_lambda_.1} parent=11 // pred_fallthru
        _
      // Predicated region
      $region17: #{_lambda_.1} parent=11 // pred_check
        %p473 = pneg %p93
      $region18: #{_lambda_.1} parent=11 // pred_check_branch
        %475 = sbr.rel (%p473) target = $region20
      $region19: #{_lambda_.1} parent=11 // pred_region
        _
      $region20: #{_lambda_.1} parent=11 // pred_fallthru
        _
      // Predicated region
      $region21: #{_lambda_.1} parent=11 // pred_check
        %p476 = pneg %p114
      $region22: #{_lambda_.1} parent=11 // pred_check_branch
        %478 = sbr.rel (%p476) target = $region24
      $region23: #{_lambda_.1} parent=11 // pred_region
        _
      $region24: #{_lambda_.1} parent=11 // pred_fallthru
        _
      // Predicated region
      $region25: #{_lambda_.1} parent=11 // pred_check
        %p479 = pneg %p135
      $region26: #{_lambda_.1} parent=11 // pred_check_branch
        %481 = sbr.rel (%p479) target = $region28
      $region27: #{_lambda_.1} parent=11 // pred_region
        _
      $region28: #{_lambda_.1} parent=11 // pred_fallthru
        _
      // Predicated region
      $region29: #{_lambda_.1} parent=11 // pred_check
        %p482 = pneg %p156
      $region30: #{_lambda_.1} parent=11 // pred_check_branch
        %484 = sbr.rel (%p482) target = $region32
      $region31: #{_lambda_.1} parent=11 // pred_region
        _
      $region32: #{_lambda_.1} parent=11 // pred_fallthru
        _
      // Predicated region
      $region33: #{_lambda_.1} parent=11 // pred_check
        %p485 = pneg %p177
      $region34: #{_lambda_.1} parent=11 // pred_check_branch
        %487 = sbr.rel (%p485) target = $region36
      $region35: #{_lambda_.1} parent=11 // pred_region
        _
      $region36: #{_lambda_.1} parent=11 // pred_fallthru
        _
      // Predicated region
      $region37: #{_lambda_.1} parent=11 // pred_check
        %p488 = pneg %p198
      $region38: #{_lambda_.1} parent=11 // pred_check_branch
        %490 = sbr.rel (%p488) target = $region40
      $region39: #{_lambda_.1} parent=11 // pred_region
        _
      $region40: #{_lambda_.1} parent=11 // pred_fallthru
        _
      // Predicated region
      $region41: #{_lambda_.1} parent=11 // pred_check
        %p491 = pneg %p219
      $region42: #{_lambda_.1} parent=11 // pred_check_branch
        %493 = sbr.rel (%p491) target = $region44
      $region43: #{_lambda_.1} parent=11 // pred_region
        _
      $region44: #{_lambda_.1} parent=11 // pred_fallthru
        _
      // Predicated region
      $region45: #{_lambda_.1} parent=11 // pred_check
        %p494 = pneg %p240
      $region46: #{_lambda_.1} parent=11 // pred_check_branch
        %496 = sbr.rel (%p494) target = $region48
      $region47: #{_lambda_.1} parent=11 // pred_region
        _
      $region48: #{_lambda_.1} parent=11 // pred_fallthru
        _
      // Predicated region
      $region49: #{_lambda_.1} parent=11 // pred_check
        %p497 = pneg %p261
      $region50: #{_lambda_.1} parent=11 // pred_check_branch
        %499 = sbr.rel (%p497) target = $region52
      $region51: #{_lambda_.1} parent=11 // pred_region
        _
      $region52: #{_lambda_.1} parent=11 // pred_fallthru
        _
      // Predicated region
      $region53: #{_lambda_.1} parent=11 // pred_check
        %p500 = pneg %p282
      $region54: #{_lambda_.1} parent=11 // pred_check_branch
        %502 = sbr.rel (%p500) target = $region56
      $region55: #{_lambda_.1} parent=11 // pred_region
        _
      $region56: #{_lambda_.1} parent=11 // pred_fallthru
        _
      // Predicated region
      $region57: #{_lambda_.1} parent=11 // pred_check
        %p503 = pneg %p303
      $region58: #{_lambda_.1} parent=11 // pred_check_branch
        %505 = sbr.rel (%p503) target = $region60
      $region59: #{_lambda_.1} parent=11 // pred_region
        _
      $region60: #{_lambda_.1} parent=11 // pred_fallthru
        _
      // Predicated region
      $region61: #{_lambda_.1} parent=11 // pred_check
        %p506 = pneg %p324
      $region62: #{_lambda_.1} parent=11 // pred_check_branch
        %508 = sbr.rel (%p506) target = $region64
      $region63: #{_lambda_.1} parent=11 // pred_region
        _
      $region64: #{_lambda_.1} parent=11 // pred_fallthru
        _
      // Predicated region
      $region65: #{_lambda_.1} parent=11 // pred_check
        %p509 = pneg %p345
      $region66: #{_lambda_.1} parent=11 // pred_check_branch
        %511 = sbr.rel (%p509) target = $region68
      $region67: #{_lambda_.1} parent=11 // pred_region
        _
      $region68: #{_lambda_.1} parent=11 // pred_fallthru
        _
      // Predicated region
      $region69: #{_lambda_.1} parent=11 // pred_check
        %p512 = pneg %p366
      $region70: #{_lambda_.1} parent=11 // pred_check_branch
        %514 = sbr.rel (%p512) target = $region72
      $region71: #{_lambda_.1} parent=11 // pred_region
        _
      $region72: #{_lambda_.1} parent=11 // pred_fallthru
        _
      // Predicated region
      $region73: #{_lambda_.1} parent=11 // pred_check
        %p515 = pneg %p387
      $region74: #{_lambda_.1} parent=11 // pred_check_branch
        %517 = sbr.rel (%p515) target = $region76
      $region75: #{_lambda_.1} parent=11 // pred_region
        _
      $region76: #{_lambda_.1} parent=11 // pred_fallthru
        _
      // Predicated region
      $region77: #{_lambda_.1} parent=11 // pred_check
        %p518 = pneg %p408
      $region78: #{_lambda_.1} parent=11 // pred_check_branch
        %520 = sbr.rel (%p518) target = $region80
      $region79: #{_lambda_.1} parent=11 // pred_region
        _
      $region80: #{_lambda_.1} parent=11 // pred_fallthru
        _
      // Predicated region
      $region81: #{_lambda_.1} parent=11 // pred_check
        %p521 = pneg %p429
      $region82: #{_lambda_.1} parent=11 // pred_check_branch
        %523 = sbr.rel (%p521) target = $region84
      $region83: #{_lambda_.1} parent=11 // pred_region
        _
      $region84: #{_lambda_.1} parent=11 // pred_fallthru
        _
    $region12: #{_lambda_.1} parent=5 // pred_fallthru
      _
    %p524 = scmp.lt.s32.totalorder %s25, 2
    // Predicated region
    $region85: #{_lambda_.1} parent=5 // pred_check
      %p525 = pneg %p524
    $region86: #{_lambda_.1} parent=5 // pred_check_branch
      %527 = sbr.rel (%p525) target = $region88
    $region87: #{_lambda_.1} parent=5 // pred_region
      // Predicated region
      $region89: #{_lambda_.1} parent=87 // pred_check
        %p528 = pneg %p45
      $region90: #{_lambda_.1} parent=87 // pred_check_branch
        %530 = sbr.rel (%p528) target = $region92
      $region91: #{_lambda_.1} parent=87 // pred_region
        %s531 = smul.u32 2, %s25
        %p532 = scmp.lt.s32.totalorder %s531, 3
        %s533 = scalar_select %p532, %s531, 3
        %s534 = smul.addr %s533, 2
        %s535 = scalar_lea.vmem %s0, %s534
        %s536 = smul.u32 2, %s25
      $region92: #{_lambda_.1} parent=87 // pred_fallthru
        _
    $region88: #{_lambda_.1} parent=5 // pred_fallthru
      _
    %p537 = scmp.le.s32.totalorder 1, %s25
    %p538 = scmp.lt.s32.totalorder %s25, 3
    %p539 = pnand %p537, %p538
    %p540 = pneg %p539
    // Predicated region
    $region93: #{_lambda_.1} parent=5 // pred_check
      _
    $region94: #{_lambda_.1} parent=5 // pred_check_branch
      %542 = sbr.rel (%p539) target = $region96
    $region95: #{_lambda_.1} parent=5 // pred_region
      %s543 = ssub.s32 %s25, 1
      %s544 = smul.u32 2, %s30
      %p545 = scmp.lt.s32.totalorder %s544, 3
      %s546 = scalar_select %p545, %s544, 3
      %s547 = smul.addr %s546, 2
      %s548 = scalar_lea.vmem %s0, %s547
      %p549 = pneg %p51
      %p550 = pneg %p48
      %p551 = pneg %p72
      %p552 = pneg %p69
      %p553 = pneg %p93
      %p554 = pneg %p90
      %p555 = pneg %p114
      %p556 = pneg %p111
      %p557 = pneg %p135
      %p558 = pneg %p132
      %p559 = pneg %p156
      %p560 = pneg %p153
      %p561 = pneg %p177
      %p562 = pneg %p174
      %p563 = pneg %p198
      %p564 = pneg %p195
      %p565 = pneg %p219
      %p566 = pneg %p216
      %p567 = pneg %p240
      %p568 = pneg %p237
      %p569 = pneg %p261
      %p570 = pneg %p258
      %p571 = pneg %p282
      %p572 = pneg %p279
      %p573 = pneg %p303
      %p574 = pneg %p300
      %p575 = pneg %p324
      %p576 = pneg %p321
      %p577 = pneg %p345
      %p578 = pneg %p342
      %p579 = pneg %p366
      %p580 = pneg %p363
      %p581 = pneg %p387
      %p582 = pneg %p384
      %p583 = pneg %p408
      %p584 = pneg %p405
      %p585 = pneg %p429
      %p586 = pneg %p426
      %p587 = pneg %p455
      %p588 = pneg %p452
      %s589 = smul.u32 2, %s30
      %p590 = scmp.lt.s32.totalorder %s589, 3
      %s591 = scalar_select %p590, %s589, 3
      %s592 = smul.addr %s591, 2
      %s593 = scalar_lea.vmem %s19, %s592
      %s594 = smul.u32 2, %s30
      %p595 = scmp.lt.s32.totalorder %s594, 3
      %s596 = scalar_select %p595, %s594, 3
      %s597 = smul.addr %s596, 2
      %s598 = scalar_lea.vmem %s0, %s597
      %s599 = smul.u32 2, %s30
      %s600 = smul.u32 2, %s30
      %p601 = scmp.lt.s32.totalorder %s600, 3
      %s602 = scalar_select %p601, %s600, 3
      %s603 = smul.addr %s602, 2
      %s604 = scalar_lea.vmem %s19, %s603
      %s605 = smul.u32 2, %s30
      %v607 = vld [vmem:[%s2] sm:$0xf]
      %v608 = vld [vmem:[%s1] sm:$0xff]
      %v609 = vld [vmem:[%s1 + $0x8] sm:$0xff]
      %610 = vst [vmem:[#allocation2] sm:$0xff] 0
      %611 = vst [vmem:[#allocation2 + $0x8] sm:$0xff] 0
      %612 = vst [vmem:[#allocation2 + $0x10] sm:$0xff] 0
      %613 = vst [vmem:[#allocation2 + $0x18] sm:$0xff] 0
      %614 = vst [vmem:[#allocation2 + $0x20] sm:$0xff] 0
      %615 = vst [vmem:[#allocation2 + $0x28] sm:$0xff] 0
      %616 = vst [vmem:[#allocation2 + $0x30] sm:$0xff] 0
      %617 = vst [vmem:[#allocation2 + $0x38] sm:$0xff] 0
      %618 = vst [vmem:[#allocation2 + $0x40] sm:$0xff] 0
      %v619 = vld [vmem:[%s598] sm:$0xf]
      %v620 = vld [vmem:[%s4] sm:$0x3]
      %v621 = vld [vmem:[%s5] sm:$0xf]
      %623 = vset.pattern.permute.xlu0 0
      %624 = vperm.xlu0 %623, %v621
      %v625 = vpop.permute.xlu0 %624
      %v629 = vunpack.c.l.s4 1983009808
      %v630 = vunpack.c.0.s8 %v629
      %v631 = vlaneseq
      %v632 = vshrl.u32 %v631, 7
      %v633 = vsub.s32 %v630, %v632
      %v634 = vrot.slane %v619, %v633
      %v635 = vcombine.high %v634, %v634
      %vm636 = vcmask 31744
      %v638 = vsel %vm636, %v620, 0
      %vm640 = vcmask 1041408
      %v642 = vsel %vm640, %v634, 0
      %v645 = vsel %vm640, %v635, 0
      %647 = vmatprep.subr.bf16.mxu0 %v645
      %648 = vmatpush1.bf16.msra.mxu0 %v642
      %649 = vmatprep.subr.bf16.mxu0 0
      %650 = vmatpush1.bf16.msra.mxu0 0
      %651 = vmatprep.subr.bf16.mxu0 0
      %652 = vmatpush1.bf16.msra.mxu0 0
      %653 = vmatprep.subr.bf16.mxu0 0
      %654 = vmatpush1.bf16.msra.mxu0 0
      %655 = vmatprep.subr.bf16.mxu0 0
      %656 = vmatpush1.bf16.msra.mxu0 0
      %657 = vmatprep.subr.bf16.mxu0 0
      %658 = vmatpush1.bf16.msra.mxu0 0
      %659 = vmatprep.subr.bf16.mxu0 0
      %660 = vmatpush1.bf16.msra.mxu0 0
      %661 = vmatprep.subr.bf16.mxu0 0
      %662 = vmatpush1.bf16.msra.mxu0 0
      %663 = vmatprep.subr.bf16.mxu0 0
      %664 = vmatpush1.bf16.msra.mxu0 0
      %665 = vmatprep.subr.bf16.mxu0 0
      %666 = vmatpush1.bf16.msra.mxu0 0
      %667 = vmatprep.subr.bf16.mxu0 0
      %668 = vmatpush1.bf16.msra.mxu0 0
      %669 = vmatprep.subr.bf16.mxu0 0
      %670 = vmatpush1.bf16.msra.mxu0 0
      %671 = vmatprep.subr.bf16.mxu0 0
      %672 = vmatpush1.bf16.msra.mxu0 0
      %673 = vmatprep.subr.bf16.mxu0 0
      %674 = vmatpush1.bf16.msra.mxu0 0
      %675 = vmatprep.subr.bf16.mxu0 0
      %676 = vmatpush1.bf16.msra.mxu0 0
      %677 = vmatprep.subr.bf16.mxu0 0
      %678 = vmatpush1.bf16.msra.mxu0 0
      %679 = vmatprep.mubr.bf16.mxu0 0
      %680 = vmatmul.mubr.bf16.gmra.mrb[0].mxu0 %v638
      %v681 = vpop.f32.mrb[0].mxu0
      %v682 = vadd.f32 %v625, %v681
      %v683 = vpop.f32.mrb[0].mxu0
      %v684 = vadd.f32 %v625, %v683
      %v685 = vpop.f32.mrb[0].mxu0
      %v686 = vpop.f32.mrb[0].mxu0
      %687 = vdwg.mxu0
      %v688 = vmin.f32 %v682, 20.0
      %v689 = vmin.f32 %v684, 20.0
      %v690 = vmul.f32 %v688, 1.442695
      %v691 = vpow.pop %v690
      %v692 = vmul.f32 %v689, 1.442695
      %v693 = vpow.pop %v692
      %v694 = vadd.f32 %v691, 1.0
      %v695 = vadd.f32 %v693, 1.0
      %v696 = vmul.f32 %v694, %v694
      %v697 = vmul.f32 %v695, %v695
      %v698 = vsub.f32 %v696, 1.0
      %v699 = vsub.f32 %v697, 1.0
      %v700 = vmul.f32 %v682, %v698
      %v701 = vmul.f32 %v684, %v699
      %v702 = vadd.f32 %v696, 1.0
      %v703 = vadd.f32 %v697, 1.0
      %v704 = vrcp.pop %v702
      %v705 = vrcp.pop %v703
      %v706 = vmul.f32 %v700, %v704
      %v707 = vmul.f32 %v701, %v705
      %709 = vset.pattern.permute.xlu0 0
      %710 = vperm.xlu0 %709, %v607
      %v711 = vpop.permute.xlu0 %710
      %v713 = vmul.f32 %v706, %v711
      %v714 = vmul.f32 %v707, %v711
      %v715 = vpack.c.bf16 %v713, %v713
      %v716 = vpack.c.bf16 %v714, %v714
      %v717 = vld [vmem:[%s6] sm:$0x3]
      %v718 = vld [vmem:[%s3] sm:$0xf]
      %720 = vset.pattern.permute.xlu0 0
      %721 = vperm.xlu0 %720, %v718
      %v722 = vpop.permute.xlu0 %721
      %v724 = vmul.f32 %v722, %v713
      %v725 = vmul.f32 %v722, %v714
      %v726 = vld [vmem:[%s7] sm:$0x3]
      %v727 = vld [vmem:[%s8] sm:$0xf]
      %729 = vset.pattern.permute.xlu0 0
      %730 = vperm.xlu0 %729, %v727
      %v731 = vpop.permute.xlu0 %730
      %v734 = vsel %vm636, %v726, 0
      %v737 = vsel %vm640, %v715, 0
      %v740 = vsel %vm640, %v716, 0
      %742 = vmatprep.subr.bf16.mxu0 %v740
      %743 = vmatpush1.bf16.msra.mxu0 %v737
      %744 = vmatprep.subr.bf16.mxu0 0
      %745 = vmatpush1.bf16.msra.mxu0 0
      %746 = vmatprep.subr.bf16.mxu0 0
      %747 = vmatpush1.bf16.msra.mxu0 0
      %748 = vmatprep.subr.bf16.mxu0 0
      %749 = vmatpush1.bf16.msra.mxu0 0
      %750 = vmatprep.subr.bf16.mxu0 0
      %751 = vmatpush1.bf16.msra.mxu0 0
      %752 = vmatprep.subr.bf16.mxu0 0
      %753 = vmatpush1.bf16.msra.mxu0 0
      %754 = vmatprep.subr.bf16.mxu0 0
      %755 = vmatpush1.bf16.msra.mxu0 0
      %756 = vmatprep.subr.bf16.mxu0 0
      %757 = vmatpush1.bf16.msra.mxu0 0
      %758 = vmatprep.subr.bf16.mxu0 0
      %759 = vmatpush1.bf16.msra.mxu0 0
      %760 = vmatprep.subr.bf16.mxu0 0
      %761 = vmatpush1.bf16.msra.mxu0 0
      %762 = vmatprep.subr.bf16.mxu0 0
      %763 = vmatpush1.bf16.msra.mxu0 0
      %764 = vmatprep.subr.bf16.mxu0 0
      %765 = vmatpush1.bf16.msra.mxu0 0
      %766 = vmatprep.subr.bf16.mxu0 0
      %767 = vmatpush1.bf16.msra.mxu0 0
      %768 = vmatprep.subr.bf16.mxu0 0
      %769 = vmatpush1.bf16.msra.mxu0 0
      %770 = vmatprep.subr.bf16.mxu0 0
      %771 = vmatpush1.bf16.msra.mxu0 0
      %772 = vmatprep.subr.bf16.mxu0 0
      %773 = vmatpush1.bf16.msra.mxu0 0
      %774 = vmatprep.mubr.bf16.mxu0 0
      %775 = vmatmul.mubr.bf16.gmra.mrb[0].mxu0 %v734
      %v776 = vpop.f32.mrb[0].mxu0
      %v777 = vadd.f32 %v731, %v776
      %v778 = vpop.f32.mrb[0].mxu0
      %v779 = vadd.f32 %v731, %v778
      %v780 = vpop.f32.mrb[0].mxu0
      %v781 = vpop.f32.mrb[0].mxu0
      %782 = vdwg.mxu0
      %v783 = vmin.f32 %v777, 20.0
      %v784 = vmin.f32 %v779, 20.0
      %v785 = vmul.f32 %v783, 1.442695
      %v786 = vpow.pop %v785
      %v787 = vmul.f32 %v784, 1.442695
      %v788 = vpow.pop %v787
      %v789 = vadd.f32 %v786, 1.0
      %v790 = vadd.f32 %v788, 1.0
      %v791 = vmul.f32 %v789, %v789
      %v792 = vmul.f32 %v790, %v790
      %v793 = vsub.f32 %v791, 1.0
      %v794 = vsub.f32 %v792, 1.0
      %v795 = vmul.f32 %v777, %v793
      %v796 = vmul.f32 %v779, %v794
      %v797 = vadd.f32 %v791, 1.0
      %v798 = vadd.f32 %v792, 1.0
      %v799 = vrcp.pop %v797
      %v800 = vrcp.pop %v798
      %v801 = vmul.f32 %v795, %v799
      %v802 = vmul.f32 %v796, %v800
      %v803 = vmul.f32 %v801, %v711
      %v804 = vmul.f32 %v802, %v711
      %805 = vrot.lane.b32.xlu0 %v803, 17
      %v806 = vpop.permute.xlu0 %805
      %807 = vrot.lane.b32.xlu0 %v804, 17
      %v808 = vpop.permute.xlu0 %807
      %v809 = vlaneseq
      %v810 = vand.u32 %v809, 127
      %vm811 = vcmp.lt.s32.totalorder %v810, 17
      %v812 = vsel %vm811, %v806, %v808
      %v813 = vsel %vm811, %v808, %v806
      %v814 = vlaneseq
      %v815 = vshrl.u32 %v814, 7
      %v816 = vsub.s32 0, %v815
      %v817 = vrot.slane %v608, %v816
      %v818 = vlaneseq
      %v819 = vshrl.u32 %v818, 7
      %v820 = vsub.s32 0, %v819
      %v821 = vrot.slane %v609, %v820
      %v822 = vmul.f32 %v813, %v817
      %v823 = vmul.f32 %v812, %v821
      %v824 = vpack.c.bf16 %v822, %v822
      %v825 = vpack.c.bf16 %v823, %v823
      %v828 = vunpack.c.l.b16 %v824
      %v829 = vunpack.c.l.b16 %v825
      %v830 = vpack.c.b16 %v829, %v828
      %832 = vst [vmem:[#allocation2] sm:$0x33] %v830
      %833 = vrot.lane.b32.xlu0 %v803, 16
      %v834 = vpop.permute.xlu0 %833
      %835 = vrot.lane.b32.xlu0 %v804, 16
      %v836 = vpop.permute.xlu0 %835
      %vm837 = vcmp.lt.s32.totalorder %v810, 16
      %v838 = vsel %vm837, %v834, %v836
      %v839 = vsel %vm837, %v836, %v834
      %v840 = vlaneseq
      %v841 = vshrl.u32 %v840, 7
      %v842 = vsub.s32 1, %v841
      %v843 = vrot.slane %v608, %v842
      %v844 = vlaneseq
      %v845 = vshrl.u32 %v844, 7
      %v846 = vsub.s32 1, %v845
      %v847 = vrot.slane %v609, %v846
      %v848 = vmul.f32 %v839, %v843
      %v849 = vmul.f32 %v838, %v847
      %v850 = vpack.c.bf16 %v848, %v848
      %v851 = vpack.c.bf16 %v849, %v849
      %v854 = vunpack.c.l.b16 %v850
      %v855 = vunpack.c.l.b16 %v851
      %v856 = vpack.c.b16 %v855, %v854
      %858 = vst [vmem:[#allocation2 + $0x8] sm:$0x33] %v856
      %859 = vrot.lane.b32.xlu0 %v803, 15
      %v860 = vpop.permute.xlu0 %859
      %861 = vrot.lane.b32.xlu0 %v804, 15
      %v862 = vpop.permute.xlu0 %861
      %vm863 = vcmp.lt.s32.totalorder %v810, 15
      %v864 = vsel %vm863, %v860, %v862
      %v865 = vsel %vm863, %v862, %v860
      %v866 = vlaneseq
      %v867 = vshrl.u32 %v866, 7
      %v868 = vsub.s32 2, %v867
      %v869 = vrot.slane %v608, %v868
      %v870 = vlaneseq
      %v871 = vshrl.u32 %v870, 7
      %v872 = vsub.s32 2, %v871
      %v873 = vrot.slane %v609, %v872
      %v874 = vmul.f32 %v865, %v869
      %v875 = vmul.f32 %v864, %v873
      %v876 = vpack.c.bf16 %v874, %v874
      %v877 = vpack.c.bf16 %v875, %v875
      %v880 = vunpack.c.l.b16 %v876
      %v881 = vunpack.c.l.b16 %v877
      %v882 = vpack.c.b16 %v881, %v880
      %884 = vst [vmem:[#allocation2 + $0x10] sm:$0x33] %v882
      %885 = vrot.lane.b32.xlu0 %v803, 1
      %v886 = vpop.permute.xlu0 %885
      %887 = vrot.lane.b32.xlu0 %v804, 1
      %v888 = vpop.permute.xlu0 %887
      %vm889 = vcmp.lt.s32.totalorder %v810, 1
      %v890 = vsel %vm889, %v886, %v888
      %v891 = vsel %vm889, %v888, %v886
      %v892 = vlaneseq
      %v893 = vshrl.u32 %v892, 7
      %v894 = vsub.s32 3, %v893
      %v895 = vrot.slane %v608, %v894
      %v896 = vlaneseq
      %v897 = vshrl.u32 %v896, 7
      %v898 = vsub.s32 3, %v897
      %v899 = vrot.slane %v609, %v898
      %v900 = vmul.f32 %v891, %v895
      %v901 = vmul.f32 %v890, %v899
      %v902 = vpack.c.bf16 %v900, %v900
      %v903 = vpack.c.bf16 %v901, %v901
      %v906 = vunpack.c.l.b16 %v902
      %v907 = vunpack.c.l.b16 %v903
      %v908 = vpack.c.b16 %v907, %v906
      %910 = vst [vmem:[#allocation2 + $0x18] sm:$0x33] %v908
      %v911 = vpack.c.bf16 %v803, %v803
      %v912 = vpack.c.bf16 %v804, %v804
      %v915 = vunpack.c.l.b16 %v911
      %v916 = vunpack.c.l.b16 %v912
      %v917 = vpack.c.b16 %v916, %v915
      %919 = vst [vmem:[#allocation2 + $0x20] sm:$0x33] %v917
      %920 = vrot.lane.b32.xlu0 %v803, 127
      %v921 = vpop.permute.xlu0 %920
      %922 = vrot.lane.b32.xlu0 %v804, 127
      %v923 = vpop.permute.xlu0 %922
      %vm924 = vcmp.lt.s32.totalorder %v810, 127
      %v925 = vsel %vm924, %v921, %v923
      %v926 = vsel %vm924, %v923, %v921
      %v927 = vlaneseq
      %v928 = vshrl.u32 %v927, 7
      %v929 = vsub.s32 4, %v928
      %v930 = vrot.slane %v608, %v929
      %v931 = vlaneseq
      %v932 = vshrl.u32 %v931, 7
      %v933 = vsub.s32 4, %v932
      %v934 = vrot.slane %v609, %v933
      %v935 = vmul.f32 %v925, %v930
      %v936 = vmul.f32 %v926, %v934
      %v937 = vpack.c.bf16 %v935, %v935
      %v938 = vpack.c.bf16 %v936, %v936
      %v941 = vunpack.c.l.b16 %v937
      %v942 = vunpack.c.l.b16 %v938
      %v943 = vpack.c.b16 %v942, %v941
      %945 = vst [vmem:[#allocation2 + $0x28] sm:$0x33] %v943
      %946 = vrot.lane.b32.xlu0 %v803, 113
      %v947 = vpop.permute.xlu0 %946
      %948 = vrot.lane.b32.xlu0 %v804, 113
      %v949 = vpop.permute.xlu0 %948
      %vm950 = vcmp.lt.s32.totalorder %v810, 113
      %v951 = vsel %vm950, %v947, %v949
      %v952 = vsel %vm950, %v949, %v947
      %v953 = vlaneseq
      %v954 = vshrl.u32 %v953, 7
      %v955 = vsub.s32 5, %v954
      %v956 = vrot.slane %v608, %v955
      %v957 = vlaneseq
      %v958 = vshrl.u32 %v957, 7
      %v959 = vsub.s32 5, %v958
      %v960 = vrot.slane %v609, %v959
      %v961 = vmul.f32 %v951, %v956
      %v962 = vmul.f32 %v952, %v960
      %v963 = vpack.c.bf16 %v961, %v961
      %v964 = vpack.c.bf16 %v962, %v962
      %v967 = vunpack.c.l.b16 %v963
      %v968 = vunpack.c.l.b16 %v964
      %v969 = vpack.c.b16 %v968, %v967
      %971 = vst [vmem:[#allocation2 + $0x30] sm:$0x33] %v969
      %972 = vrot.lane.b32.xlu0 %v803, 112
      %v973 = vpop.permute.xlu0 %972
      %974 = vrot.lane.b32.xlu0 %v804, 112
      %v975 = vpop.permute.xlu0 %974
      %vm976 = vcmp.lt.s32.totalorder %v810, 112
      %v977 = vsel %vm976, %v973, %v975
      %v978 = vsel %vm976, %v975, %v973
      %v979 = vlaneseq
      %v980 = vshrl.u32 %v979, 7
      %v981 = vsub.s32 6, %v980
      %v982 = vrot.slane %v608, %v981
      %v983 = vlaneseq
      %v984 = vshrl.u32 %v983, 7
      %v985 = vsub.s32 6, %v984
      %v986 = vrot.slane %v609, %v985
      %v987 = vmul.f32 %v977, %v982
      %v988 = vmul.f32 %v978, %v986
      %v989 = vpack.c.bf16 %v987, %v987
      %v990 = vpack.c.bf16 %v988, %v988
      %v993 = vunpack.c.l.b16 %v989
      %v994 = vunpack.c.l.b16 %v990
      %v995 = vpack.c.b16 %v994, %v993
      %997 = vst [vmem:[#allocation2 + $0x38] sm:$0x33] %v995
      %998 = vrot.lane.b32.xlu0 %v803, 111
      %v999 = vpop.permute.xlu0 %998
      %1000 = vrot.lane.b32.xlu0 %v804, 111
      %v1001 = vpop.permute.xlu0 %1000
      %vm1002 = vcmp.lt.s32.totalorder %v810, 111
      %v1003 = vsel %vm1002, %v999, %v1001
      %v1004 = vsel %vm1002, %v1001, %v999
      %v1005 = vlaneseq
      %v1006 = vshrl.u32 %v1005, 7
      %v1007 = vsub.s32 7, %v1006
      %v1008 = vrot.slane %v608, %v1007
      %v1009 = vlaneseq
      %v1010 = vshrl.u32 %v1009, 7
      %v1011 = vsub.s32 7, %v1010
      %v1012 = vrot.slane %v609, %v1011
      %v1013 = vmul.f32 %v1003, %v1008
      %v1014 = vmul.f32 %v1004, %v1012
      %v1015 = vpack.c.bf16 %v1013, %v1013
      %v1016 = vpack.c.bf16 %v1014, %v1014
      %v1019 = vunpack.c.l.b16 %v1015
      %v1020 = vunpack.c.l.b16 %v1016
      %v1021 = vpack.c.b16 %v1020, %v1019
      %1023 = vst [vmem:[#allocation2 + $0x40] sm:$0x33] %v1021
      %v1024 = vld [vmem:[%s9] sm:$0x3]
      %v1025 = vld [vmem:[#allocation2] sm:$0xff]
      %v1026 = vld [vmem:[#allocation2 + $0x8] sm:$0xff]
      %v1027 = vld [vmem:[#allocation2 + $0x10] sm:$0xff]
      %v1028 = vld [vmem:[#allocation2 + $0x18] sm:$0xff]
      %v1029 = vld [vmem:[#allocation2 + $0x20] sm:$0xff]
      %v1030 = vld [vmem:[#allocation2 + $0x28] sm:$0xff]
      %v1031 = vld [vmem:[#allocation2 + $0x30] sm:$0xff]
      %v1032 = vld [vmem:[#allocation2 + $0x38] sm:$0xff]
      %v1033 = vld [vmem:[#allocation2 + $0x40] sm:$0xff]
      %v1034 = vld [vmem:[%s10] sm:$0xf]
      %1036 = vset.pattern.permute.xlu0 0
      %1037 = vperm.xlu0 %1036, %v1034
      %v1038 = vpop.permute.xlu0 %1037
      %v1049 = vunpack.c.l.b16 %v1025
      %v1050 = vunpack.c.h.b16 %v1025
      %v1051 = vunpack.c.l.b16 %v1026
      %v1052 = vunpack.c.h.b16 %v1026
      %v1053 = vunpack.c.l.b16 %v1027
      %v1054 = vunpack.c.h.b16 %v1027
      %v1055 = vunpack.c.l.b16 %v1028
      %v1056 = vunpack.c.h.b16 %v1028
      %v1057 = vunpack.c.l.b16 %v1029
      %v1058 = vunpack.c.h.b16 %v1029
      %v1059 = vunpack.c.l.b16 %v1030
      %v1060 = vunpack.c.h.b16 %v1030
      %v1061 = vunpack.c.l.b16 %v1031
      %v1062 = vunpack.c.h.b16 %v1031
      %v1063 = vunpack.c.l.b16 %v1032
      %v1064 = vunpack.c.h.b16 %v1032
      %v1065 = vunpack.c.l.b16 %v1033
      %v1066 = vunpack.c.h.b16 %v1033
      %v1067 = vpack.c.b16 %v1051, %v1049
      %v1068 = vpack.c.b16 %v1052, %v1050
      %v1069 = vpack.c.b16 %v1055, %v1053
      %v1070 = vpack.c.b16 %v1056, %v1054
      %v1071 = vpack.c.b16 %v1059, %v1057
      %v1072 = vpack.c.b16 %v1060, %v1058
      %v1073 = vpack.c.b16 %v1063, %v1061
      %v1074 = vpack.c.b16 %v1064, %v1062
      %v1075 = vpack.c.b16 %v1065, %v1065
      %v1076 = vpack.c.b16 %v1066, %v1066
      %vm1085 = vcmask 588800
      %v1087 = vsel %vm1085, %v1024, 0
      %vm1089 = vcmask 1043456
      %v1091 = vsel %vm1089, %v1075, 0
      %v1094 = vsel %vm1089, %v1076, 0
      %1096 = vmatprep.subr.bf16.mxu0 %v1068
      %1097 = vmatpush1.bf16.msra.mxu0 %v1067
      %1098 = vmatprep.subr.bf16.mxu0 %v1070
      %1099 = vmatpush1.bf16.msra.mxu0 %v1069
      %1100 = vmatprep.subr.bf16.mxu0 %v1072
      %1101 = vmatpush1.bf16.msra.mxu0 %v1071
      %1102 = vmatprep.subr.bf16.mxu0 %v1074
      %1103 = vmatpush1.bf16.msra.mxu0 %v1073
      %1104 = vmatprep.subr.bf16.mxu0 %v1094
      %1105 = vmatpush1.bf16.msra.mxu0 %v1091
      %1106 = vmatprep.subr.bf16.mxu0 0
      %1107 = vmatpush1.bf16.msra.mxu0 0
      %1108 = vmatprep.subr.bf16.mxu0 0
      %1109 = vmatpush1.bf16.msra.mxu0 0
      %1110 = vmatprep.subr.bf16.mxu0 0
      %1111 = vmatpush1.bf16.msra.mxu0 0
      %1112 = vmatprep.subr.bf16.mxu0 0
      %1113 = vmatpush1.bf16.msra.mxu0 0
      %1114 = vmatprep.subr.bf16.mxu0 0
      %1115 = vmatpush1.bf16.msra.mxu0 0
      %1116 = vmatprep.subr.bf16.mxu0 0
      %1117 = vmatpush1.bf16.msra.mxu0 0
      %1118 = vmatprep.subr.bf16.mxu0 0
      %1119 = vmatpush1.bf16.msra.mxu0 0
      %1120 = vmatprep.subr.bf16.mxu0 0
      %1121 = vmatpush1.bf16.msra.mxu0 0
      %1122 = vmatprep.subr.bf16.mxu0 0
      %1123 = vmatpush1.bf16.msra.mxu0 0
      %1124 = vmatprep.subr.bf16.mxu0 0
      %1125 = vmatpush1.bf16.msra.mxu0 0
      %1126 = vmatprep.subr.bf16.mxu0 0
      %1127 = vmatpush1.bf16.msra.mxu0 0
      %1128 = vmatprep.mubr.bf16.mxu0 0
      %1129 = vmatmul.mubr.bf16.gmra.mrb[0].mxu0 %v1087
      %v1130 = vpop.f32.mrb[0].mxu0
      %v1131 = vadd.f32 %v1038, %v1130
      %v1132 = vpop.f32.mrb[0].mxu0
      %v1133 = vadd.f32 %v1038, %v1132
      %v1134 = vpop.f32.mrb[0].mxu0
      %v1135 = vpop.f32.mrb[0].mxu0
      %1136 = vdwg.mxu0
      %v1137 = vmin.f32 %v1131, 20.0
      %v1138 = vmin.f32 %v1133, 20.0
      %v1139 = vmul.f32 %v1137, 1.442695
      %v1140 = vpow.pop %v1139
      %v1141 = vmul.f32 %v1138, 1.442695
      %v1142 = vpow.pop %v1141
      %v1143 = vadd.f32 %v1140, 1.0
      %v1144 = vadd.f32 %v1142, 1.0
      %v1145 = vmul.f32 %v1143, %v1143
      %v1146 = vmul.f32 %v1144, %v1144
      %v1147 = vsub.f32 %v1145, 1.0
      %v1148 = vsub.f32 %v1146, 1.0
      %v1149 = vmul.f32 %v1131, %v1147
      %v1150 = vmul.f32 %v1133, %v1148
      %v1151 = vadd.f32 %v1145, 1.0
      %v1152 = vadd.f32 %v1146, 1.0
      %v1153 = vrcp.pop %v1151
      %v1154 = vrcp.pop %v1152
      %v1155 = vmul.f32 %v1149, %v1153
      %v1156 = vmul.f32 %v1150, %v1154
      %v1157 = vmul.f32 %v1155, %v711
      %v1158 = vmul.f32 %v1156, %v711
      %v1159 = vpack.c.bf16 %v1157, %v1157
      %v1160 = vpack.c.bf16 %v1158, %v1158
      %s1161 = scalar_lea.vmem %s3, 4
      %v1162 = vld [vmem:[%s1161] sm:$0xf]
      %1164 = vset.pattern.permute.xlu0 0
      %1165 = vperm.xlu0 %1164, %v1162
      %v1166 = vpop.permute.xlu0 %1165
      %v1168 = vmul.f32 %v1166, %v1157
      %v1169 = vmul.f32 %v1166, %v1158
      %v1170 = vadd.f32 %v724, %v1168
      %v1171 = vadd.f32 %v725, %v1169
      %v1172 = vld [vmem:[%s11] sm:$0x3]
      %v1173 = vld [vmem:[%s12] sm:$0xf]
      %1175 = vset.pattern.permute.xlu0 0
      %1176 = vperm.xlu0 %1175, %v1173
      %v1177 = vpop.permute.xlu0 %1176
      %v1180 = vsel %vm636, %v1172, 0
      %v1183 = vsel %vm640, %v1159, 0
      %v1186 = vsel %vm640, %v1160, 0
      %1188 = vmatprep.subr.bf16.mxu0 %v1186
      %1189 = vmatpush1.bf16.msra.mxu0 %v1183
      %1190 = vmatprep.subr.bf16.mxu0 0
      %1191 = vmatpush1.bf16.msra.mxu0 0
      %1192 = vmatprep.subr.bf16.mxu0 0
      %1193 = vmatpush1.bf16.msra.mxu0 0
      %1194 = vmatprep.subr.bf16.mxu0 0
      %1195 = vmatpush1.bf16.msra.mxu0 0
      %1196 = vmatprep.subr.bf16.mxu0 0
      %1197 = vmatpush1.bf16.msra.mxu0 0
      %1198 = vmatprep.subr.bf16.mxu0 0
      %1199 = vmatpush1.bf16.msra.mxu0 0
      %1200 = vmatprep.subr.bf16.mxu0 0
      %1201 = vmatpush1.bf16.msra.mxu0 0
      %1202 = vmatprep.subr.bf16.mxu0 0
      %1203 = vmatpush1.bf16.msra.mxu0 0
      %1204 = vmatprep.subr.bf16.mxu0 0
      %1205 = vmatpush1.bf16.msra.mxu0 0
      %1206 = vmatprep.subr.bf16.mxu0 0
      %1207 = vmatpush1.bf16.msra.mxu0 0
      %1208 = vmatprep.subr.bf16.mxu0 0
      %1209 = vmatpush1.bf16.msra.mxu0 0
      %1210 = vmatprep.subr.bf16.mxu0 0
      %1211 = vmatpush1.bf16.msra.mxu0 0
      %1212 = vmatprep.subr.bf16.mxu0 0
      %1213 = vmatpush1.bf16.msra.mxu0 0
      %1214 = vmatprep.subr.bf16.mxu0 0
      %1215 = vmatpush1.bf16.msra.mxu0 0
      %1216 = vmatprep.subr.bf16.mxu0 0
      %1217 = vmatpush1.bf16.msra.mxu0 0
      %1218 = vmatprep.subr.bf16.mxu0 0
      %1219 = vmatpush1.bf16.msra.mxu0 0
      %1220 = vmatprep.mubr.bf16.mxu0 0
      %1221 = vmatmul.mubr.bf16.gmra.mrb[0].mxu0 %v1180
      %v1222 = vpop.f32.mrb[0].mxu0
      %v1223 = vadd.f32 %v1177, %v1222
      %v1224 = vpop.f32.mrb[0].mxu0
      %v1225 = vadd.f32 %v1177, %v1224
      %v1226 = vpop.f32.mrb[0].mxu0
      %v1227 = vpop.f32.mrb[0].mxu0
      %1228 = vdwg.mxu0
      %v1229 = vmin.f32 %v1223, 20.0
      %v1230 = vmin.f32 %v1225, 20.0
      %v1231 = vmul.f32 %v1229, 1.442695
      %v1232 = vpow.pop %v1231
      %v1233 = vmul.f32 %v1230, 1.442695
      %v1234 = vpow.pop %v1233
      %v1235 = vadd.f32 %v1232, 1.0
      %v1236 = vadd.f32 %v1234, 1.0
      %v1237 = vmul.f32 %v1235, %v1235
      %v1238 = vmul.f32 %v1236, %v1236
      %v1239 = vsub.f32 %v1237, 1.0
      %v1240 = vsub.f32 %v1238, 1.0
      %v1241 = vmul.f32 %v1223, %v1239
      %v1242 = vmul.f32 %v1225, %v1240
      %v1243 = vadd.f32 %v1237, 1.0
      %v1244 = vadd.f32 %v1238, 1.0
      %v1245 = vrcp.pop %v1243
      %v1246 = vrcp.pop %v1244
      %v1247 = vmul.f32 %v1241, %v1245
      %v1248 = vmul.f32 %v1242, %v1246
      %v1249 = vmul.f32 %v1247, %v711
      %v1250 = vmul.f32 %v1248, %v711
      %1251 = vrot.lane.b32.xlu0 %v1249, 17
      %v1252 = vpop.permute.xlu0 %1251
      %1253 = vrot.lane.b32.xlu0 %v1250, 17
      %v1254 = vpop.permute.xlu0 %1253
      %v1255 = vsel %vm811, %v1252, %v1254
      %v1256 = vsel %vm811, %v1254, %v1252
      %v1257 = vmul.f32 %v1256, %v817
      %v1258 = vmul.f32 %v1255, %v821
      %v1259 = vpack.c.bf16 %v1257, %v1257
      %v1260 = vpack.c.bf16 %v1258, %v1258
      %v1263 = vunpack.c.l.b16 %v1259
      %v1264 = vunpack.c.l.b16 %v1260
      %v1265 = vpack.c.b16 %v1264, %v1263
      %1267 = vst [vmem:[#allocation2] sm:$0x33] %v1265
      %1268 = vrot.lane.b32.xlu0 %v1249, 16
      %v1269 = vpop.permute.xlu0 %1268
      %1270 = vrot.lane.b32.xlu0 %v1250, 16
      %v1271 = vpop.permute.xlu0 %1270
      %v1272 = vsel %vm837, %v1269, %v1271
      %v1273 = vsel %vm837, %v1271, %v1269
      %v1274 = vmul.f32 %v1273, %v843
      %v1275 = vmul.f32 %v1272, %v847
      %v1276 = vpack.c.bf16 %v1274, %v1274
      %v1277 = vpack.c.bf16 %v1275, %v1275
      %v1280 = vunpack.c.l.b16 %v1276
      %v1281 = vunpack.c.l.b16 %v1277
      %v1282 = vpack.c.b16 %v1281, %v1280
      %1284 = vst [vmem:[#allocation2 + $0x8] sm:$0x33] %v1282
      %1285 = vrot.lane.b32.xlu0 %v1249, 15
      %v1286 = vpop.permute.xlu0 %1285
      %1287 = vrot.lane.b32.xlu0 %v1250, 15
      %v1288 = vpop.permute.xlu0 %1287
      %v1289 = vsel %vm863, %v1286, %v1288
      %v1290 = vsel %vm863, %v1288, %v1286
      %v1291 = vmul.f32 %v1290, %v869
      %v1292 = vmul.f32 %v1289, %v873
      %v1293 = vpack.c.bf16 %v1291, %v1291
      %v1294 = vpack.c.bf16 %v1292, %v1292
      %v1297 = vunpack.c.l.b16 %v1293
      %v1298 = vunpack.c.l.b16 %v1294
      %v1299 = vpack.c.b16 %v1298, %v1297
      %1301 = vst [vmem:[#allocation2 + $0x10] sm:$0x33] %v1299
      %1302 = vrot.lane.b32.xlu0 %v1249, 1
      %v1303 = vpop.permute.xlu0 %1302
      %1304 = vrot.lane.b32.xlu0 %v1250, 1
      %v1305 = vpop.permute.xlu0 %1304
      %v1306 = vsel %vm889, %v1303, %v1305
      %v1307 = vsel %vm889, %v1305, %v1303
      %v1308 = vmul.f32 %v1307, %v895
      %v1309 = vmul.f32 %v1306, %v899
      %v1310 = vpack.c.bf16 %v1308, %v1308
      %v1311 = vpack.c.bf16 %v1309, %v1309
      %v1314 = vunpack.c.l.b16 %v1310
      %v1315 = vunpack.c.l.b16 %v1311
      %v1316 = vpack.c.b16 %v1315, %v1314
      %1318 = vst [vmem:[#allocation2 + $0x18] sm:$0x33] %v1316
      %v1319 = vpack.c.bf16 %v1249, %v1249
      %v1320 = vpack.c.bf16 %v1250, %v1250
      %v1323 = vunpack.c.l.b16 %v1319
      %v1324 = vunpack.c.l.b16 %v1320
      %v1325 = vpack.c.b16 %v1324, %v1323
      %1327 = vst [vmem:[#allocation2 + $0x20] sm:$0x33] %v1325
      %1328 = vrot.lane.b32.xlu0 %v1249, 127
      %v1329 = vpop.permute.xlu0 %1328
      %1330 = vrot.lane.b32.xlu0 %v1250, 127
      %v1331 = vpop.permute.xlu0 %1330
      %v1332 = vsel %vm924, %v1329, %v1331
      %v1333 = vsel %vm924, %v1331, %v1329
      %v1334 = vmul.f32 %v1332, %v930
      %v1335 = vmul.f32 %v1333, %v934
      %v1336 = vpack.c.bf16 %v1334, %v1334
      %v1337 = vpack.c.bf16 %v1335, %v1335
      %v1340 = vunpack.c.l.b16 %v1336
      %v1341 = vunpack.c.l.b16 %v1337
      %v1342 = vpack.c.b16 %v1341, %v1340
      %1344 = vst [vmem:[#allocation2 + $0x28] sm:$0x33] %v1342
      %1345 = vrot.lane.b32.xlu0 %v1249, 113
      %v1346 = vpop.permute.xlu0 %1345
      %1347 = vrot.lane.b32.xlu0 %v1250, 113
      %v1348 = vpop.permute.xlu0 %1347
      %v1349 = vsel %vm950, %v1346, %v1348
      %v1350 = vsel %vm950, %v1348, %v1346
      %v1351 = vmul.f32 %v1349, %v956
      %v1352 = vmul.f32 %v1350, %v960
      %v1353 = vpack.c.bf16 %v1351, %v1351
      %v1354 = vpack.c.bf16 %v1352, %v1352
      %v1357 = vunpack.c.l.b16 %v1353
      %v1358 = vunpack.c.l.b16 %v1354
      %v1359 = vpack.c.b16 %v1358, %v1357
      %1361 = vst [vmem:[#allocation2 + $0x30] sm:$0x33] %v1359
      %1362 = vrot.lane.b32.xlu0 %v1249, 112
      %v1363 = vpop.permute.xlu0 %1362
      %1364 = vrot.lane.b32.xlu0 %v1250, 112
      %v1365 = vpop.permute.xlu0 %1364
      %v1366 = vsel %vm976, %v1363, %v1365
      %v1367 = vsel %vm976, %v1365, %v1363
      %v1368 = vmul.f32 %v1366, %v982
      %v1369 = vmul.f32 %v1367, %v986
      %v1370 = vpack.c.bf16 %v1368, %v1368
      %v1371 = vpack.c.bf16 %v1369, %v1369
      %v1374 = vunpack.c.l.b16 %v1370
      %v1375 = vunpack.c.l.b16 %v1371
      %v1376 = vpack.c.b16 %v1375, %v1374
      %1378 = vst [vmem:[#allocation2 + $0x38] sm:$0x33] %v1376
      %1379 = vrot.lane.b32.xlu0 %v1249, 111
      %v1380 = vpop.permute.xlu0 %1379
      %1381 = vrot.lane.b32.xlu0 %v1250, 111
      %v1382 = vpop.permute.xlu0 %1381
      %v1383 = vsel %vm1002, %v1380, %v1382
      %v1384 = vsel %vm1002, %v1382, %v1380
      %v1385 = vmul.f32 %v1383, %v1008
      %v1386 = vmul.f32 %v1384, %v1012
      %v1387 = vpack.c.bf16 %v1385, %v1385
      %v1388 = vpack.c.bf16 %v1386, %v1386
      %v1391 = vunpack.c.l.b16 %v1387
      %v1392 = vunpack.c.l.b16 %v1388
      %v1393 = vpack.c.b16 %v1392, %v1391
      %1395 = vst [vmem:[#allocation2 + $0x40] sm:$0x33] %v1393
      %v1396 = vld [vmem:[%s13] sm:$0x3]
      %v1397 = vld [vmem:[#allocation2] sm:$0xff]
      %v1398 = vld [vmem:[#allocation2 + $0x8] sm:$0xff]
      %v1399 = vld [vmem:[#allocation2 + $0x10] sm:$0xff]
      %v1400 = vld [vmem:[#allocation2 + $0x18] sm:$0xff]
      %v1401 = vld [vmem:[#allocation2 + $0x20] sm:$0xff]
      %v1402 = vld [vmem:[#allocation2 + $0x28] sm:$0xff]
      %v1403 = vld [vmem:[#allocation2 + $0x30] sm:$0xff]
      %v1404 = vld [vmem:[#allocation2 + $0x38] sm:$0xff]
      %v1405 = vld [vmem:[#allocation2 + $0x40] sm:$0xff]
      %v1406 = vld [vmem:[%s14] sm:$0xf]
      %1408 = vset.pattern.permute.xlu0 0
      %1409 = vperm.xlu0 %1408, %v1406
      %v1410 = vpop.permute.xlu0 %1409
      %v1421 = vunpack.c.l.b16 %v1397
      %v1422 = vunpack.c.h.b16 %v1397
      %v1423 = vunpack.c.l.b16 %v1398
      %v1424 = vunpack.c.h.b16 %v1398
      %v1425 = vunpack.c.l.b16 %v1399
      %v1426 = vunpack.c.h.b16 %v1399
      %v1427 = vunpack.c.l.b16 %v1400
      %v1428 = vunpack.c.h.b16 %v1400
      %v1429 = vunpack.c.l.b16 %v1401
      %v1430 = vunpack.c.h.b16 %v1401
      %v1431 = vunpack.c.l.b16 %v1402
      %v1432 = vunpack.c.h.b16 %v1402
      %v1433 = vunpack.c.l.b16 %v1403
      %v1434 = vunpack.c.h.b16 %v1403
      %v1435 = vunpack.c.l.b16 %v1404
      %v1436 = vunpack.c.h.b16 %v1404
      %v1437 = vunpack.c.l.b16 %v1405
      %v1438 = vunpack.c.h.b16 %v1405
      %v1439 = vpack.c.b16 %v1423, %v1421
      %v1440 = vpack.c.b16 %v1424, %v1422
      %v1441 = vpack.c.b16 %v1427, %v1425
      %v1442 = vpack.c.b16 %v1428, %v1426
      %v1443 = vpack.c.b16 %v1431, %v1429
      %v1444 = vpack.c.b16 %v1432, %v1430
      %v1445 = vpack.c.b16 %v1435, %v1433
      %v1446 = vpack.c.b16 %v1436, %v1434
      %v1447 = vpack.c.b16 %v1437, %v1437
      %v1448 = vpack.c.b16 %v1438, %v1438
      %v1458 = vsel %vm1085, %v1396, 0
      %v1461 = vsel %vm1089, %v1447, 0
      %v1464 = vsel %vm1089, %v1448, 0
      %1466 = vmatprep.subr.bf16.mxu0 %v1440
      %1467 = vmatpush1.bf16.msra.mxu0 %v1439
      %1468 = vmatprep.subr.bf16.mxu0 %v1442
      %1469 = vmatpush1.bf16.msra.mxu0 %v1441
      %1470 = vmatprep.subr.bf16.mxu0 %v1444
      %1471 = vmatpush1.bf16.msra.mxu0 %v1443
      %1472 = vmatprep.subr.bf16.mxu0 %v1446
      %1473 = vmatpush1.bf16.msra.mxu0 %v1445
      %1474 = vmatprep.subr.bf16.mxu0 %v1464
      %1475 = vmatpush1.bf16.msra.mxu0 %v1461
      %1476 = vmatprep.subr.bf16.mxu0 0
      %1477 = vmatpush1.bf16.msra.mxu0 0
      %1478 = vmatprep.subr.bf16.mxu0 0
      %1479 = vmatpush1.bf16.msra.mxu0 0
      %1480 = vmatprep.subr.bf16.mxu0 0
      %1481 = vmatpush1.bf16.msra.mxu0 0
      %1482 = vmatprep.subr.bf16.mxu0 0
      %1483 = vmatpush1.bf16.msra.mxu0 0
      %1484 = vmatprep.subr.bf16.mxu0 0
      %1485 = vmatpush1.bf16.msra.mxu0 0
      %1486 = vmatprep.subr.bf16.mxu0 0
      %1487 = vmatpush1.bf16.msra.mxu0 0
      %1488 = vmatprep.subr.bf16.mxu0 0
      %1489 = vmatpush1.bf16.msra.mxu0 0
      %1490 = vmatprep.subr.bf16.mxu0 0
      %1491 = vmatpush1.bf16.msra.mxu0 0
      %1492 = vmatprep.subr.bf16.mxu0 0
      %1493 = vmatpush1.bf16.msra.mxu0 0
      %1494 = vmatprep.subr.bf16.mxu0 0
      %1495 = vmatpush1.bf16.msra.mxu0 0
      %1496 = vmatprep.subr.bf16.mxu0 0
      %1497 = vmatpush1.bf16.msra.mxu0 0
      %1498 = vmatprep.mubr.bf16.mxu0 0
      %1499 = vmatmul.mubr.bf16.gmra.mrb[0].mxu0 %v1458
      %v1500 = vpop.f32.mrb[0].mxu0
      %v1501 = vadd.f32 %v1410, %v1500
      %v1502 = vpop.f32.mrb[0].mxu0
      %v1503 = vadd.f32 %v1410, %v1502
      %v1504 = vpop.f32.mrb[0].mxu0
      %v1505 = vpop.f32.mrb[0].mxu0
      %1506 = vdwg.mxu0
      %v1507 = vmin.f32 %v1501, 20.0
      %v1508 = vmin.f32 %v1503, 20.0
      %v1509 = vmul.f32 %v1507, 1.442695
      %v1510 = vpow.pop %v1509
      %v1511 = vmul.f32 %v1508, 1.442695
      %v1512 = vpow.pop %v1511
      %v1513 = vadd.f32 %v1510, 1.0
      %v1514 = vadd.f32 %v1512, 1.0
      %v1515 = vmul.f32 %v1513, %v1513
      %v1516 = vmul.f32 %v1514, %v1514
      %v1517 = vsub.f32 %v1515, 1.0
      %v1518 = vsub.f32 %v1516, 1.0
      %v1519 = vmul.f32 %v1501, %v1517
      %v1520 = vmul.f32 %v1503, %v1518
      %v1521 = vadd.f32 %v1515, 1.0
      %v1522 = vadd.f32 %v1516, 1.0
      %v1523 = vrcp.pop %v1521
      %v1524 = vrcp.pop %v1522
      %v1525 = vmul.f32 %v1519, %v1523
      %v1526 = vmul.f32 %v1520, %v1524
      %v1527 = vmul.f32 %v1525, %v711
      %v1528 = vmul.f32 %v1526, %v711
      %s1529 = scalar_lea.vmem %s3, 8
      %v1530 = vld [vmem:[%s1529] sm:$0xf]
      %1532 = vset.pattern.permute.xlu0 0
      %1533 = vperm.xlu0 %1532, %v1530
      %v1534 = vpop.permute.xlu0 %1533
      %v1536 = vmul.f32 %v1534, %v1527
      %v1537 = vmul.f32 %v1534, %v1528
      %v1538 = vadd.f32 %v1170, %v1536
      %v1539 = vadd.f32 %v1171, %v1537
      %v1540 = vld [vmem:[%s15] sm:$0xf]
      %1542 = vset.pattern.permute.xlu0 0
      %1543 = vperm.xlu0 %1542, %v1540
      %v1544 = vpop.permute.xlu0 %1543
      %v1546 = vadd.f32 %v1538, %v1544
      %v1547 = vadd.f32 %v1539, %v1544
      %v1548 = vmin.f32 %v1546, 20.0
      %v1549 = vmin.f32 %v1547, 20.0
      %v1550 = vmul.f32 %v1548, 1.442695
      %v1551 = vpow.pop %v1550
      %v1552 = vmul.f32 %v1549, 1.442695
      %v1553 = vpow.pop %v1552
      %v1554 = vadd.f32 %v1551, 1.0
      %v1555 = vadd.f32 %v1553, 1.0
      %v1556 = vmul.f32 %v1554, %v1554
      %v1557 = vmul.f32 %v1555, %v1555
      %v1558 = vsub.f32 %v1556, 1.0
      %v1559 = vsub.f32 %v1557, 1.0
      %v1560 = vmul.f32 %v1546, %v1558
      %v1561 = vmul.f32 %v1547, %v1559
      %v1562 = vadd.f32 %v1556, 1.0
      %v1563 = vadd.f32 %v1557, 1.0
      %v1564 = vrcp.pop %v1562
      %v1565 = vrcp.pop %v1563
      %v1566 = vmul.f32 %v1560, %v1564
      %v1567 = vmul.f32 %v1561, %v1565
      %v1568 = vpack.c.bf16 %v1566, %v1566
      %v1569 = vpack.c.bf16 %v1567, %v1567
      %v1572 = vunpack.c.l.b16 %v1568
      %v1573 = vunpack.c.l.b16 %v1569
      %v1574 = vpack.c.b16 %v1573, %v1572
      %1576 = vst [vmem:[#allocation2] sm:$0x33] %v1574
      %v1577 = vld [vmem:[%s16] sm:$0xf]
      %1579 = vset.pattern.permute.xlu0 0
      %1580 = vperm.xlu0 %1579, %v1577
      %v1581 = vpop.permute.xlu0 %1580
      %v1584 = vsel %vm636, %v717, 0
      %1586 = vmatprep.subr.bf16.mxu0 %v740
      %1587 = vmatpush1.bf16.msra.mxu0 %v737
      %1588 = vmatprep.subr.bf16.mxu0 0
      %1589 = vmatpush1.bf16.msra.mxu0 0
      %1590 = vmatprep.subr.bf16.mxu0 0
      %1591 = vmatpush1.bf16.msra.mxu0 0
      %1592 = vmatprep.subr.bf16.mxu0 0
      %1593 = vmatpush1.bf16.msra.mxu0 0
      %1594 = vmatprep.subr.bf16.mxu0 0
      %1595 = vmatpush1.bf16.msra.mxu0 0
      %1596 = vmatprep.subr.bf16.mxu0 0
      %1597 = vmatpush1.bf16.msra.mxu0 0
      %1598 = vmatprep.subr.bf16.mxu0 0
      %1599 = vmatpush1.bf16.msra.mxu0 0
      %1600 = vmatprep.subr.bf16.mxu0 0
      %1601 = vmatpush1.bf16.msra.mxu0 0
      %1602 = vmatprep.subr.bf16.mxu0 0
      %1603 = vmatpush1.bf16.msra.mxu0 0
      %1604 = vmatprep.subr.bf16.mxu0 0
      %1605 = vmatpush1.bf16.msra.mxu0 0
      %1606 = vmatprep.subr.bf16.mxu0 0
      %1607 = vmatpush1.bf16.msra.mxu0 0
      %1608 = vmatprep.subr.bf16.mxu0 0
      %1609 = vmatpush1.bf16.msra.mxu0 0
      %1610 = vmatprep.subr.bf16.mxu0 0
      %1611 = vmatpush1.bf16.msra.mxu0 0
      %1612 = vmatprep.subr.bf16.mxu0 0
      %1613 = vmatpush1.bf16.msra.mxu0 0
      %1614 = vmatprep.subr.bf16.mxu0 0
      %1615 = vmatpush1.bf16.msra.mxu0 0
      %1616 = vmatprep.subr.bf16.mxu0 0
      %1617 = vmatpush1.bf16.msra.mxu0 0
      %1618 = vmatprep.mubr.bf16.mxu0 0
      %1619 = vmatmul.mubr.bf16.gmra.mrb[0].mxu0 %v1584
      %v1620 = vpop.f32.mrb[0].mxu0
      %v1621 = vadd.f32 %v1581, %v1620
      %v1622 = vpop.f32.mrb[0].mxu0
      %v1623 = vadd.f32 %v1581, %v1622
      %v1624 = vpop.f32.mrb[0].mxu0
      %v1625 = vpop.f32.mrb[0].mxu0
      %1626 = vdwg.mxu0
      %v1627 = vmin.f32 %v1621, 20.0
      %v1628 = vmin.f32 %v1623, 20.0
      %v1629 = vmul.f32 %v1627, 1.442695
      %v1630 = vpow.pop %v1629
      %v1631 = vmul.f32 %v1628, 1.442695
      %v1632 = vpow.pop %v1631
      %v1633 = vadd.f32 %v1630, 1.0
      %v1634 = vadd.f32 %v1632, 1.0
      %v1635 = vmul.f32 %v1633, %v1633
      %v1636 = vmul.f32 %v1634, %v1634
      %v1637 = vsub.f32 %v1635, 1.0
      %v1638 = vsub.f32 %v1636, 1.0
      %v1639 = vmul.f32 %v1621, %v1637
      %v1640 = vmul.f32 %v1623, %v1638
      %v1641 = vadd.f32 %v1635, 1.0
      %v1642 = vadd.f32 %v1636, 1.0
      %v1643 = vrcp.pop %v1641
      %v1644 = vrcp.pop %v1642
      %v1645 = vmul.f32 %v1639, %v1643
      %v1646 = vmul.f32 %v1640, %v1644
      %v1647 = vpack.c.bf16 %v1645, %v1645
      %v1648 = vpack.c.bf16 %v1646, %v1646
      %v1651 = vunpack.c.l.b16 %v1647
      %v1652 = vunpack.c.l.b16 %v1648
      %v1653 = vpack.c.b16 %v1652, %v1651
      %1655 = vst [vmem:[#allocation2 + $0x8] sm:$0x33] %v1653
      %v1656 = vld [vmem:[%s17] sm:$0x3]
      %v1657 = vld [vmem:[#allocation2] sm:$0xff]
      %v1658 = vld [vmem:[#allocation2 + $0x8] sm:$0xff]
      %v1659 = vld [vmem:[%s18] sm:$0xf]
      %1661 = vset.pattern.permute.xlu0 0
      %1662 = vperm.xlu0 %1661, %v1659
      %v1663 = vpop.permute.xlu0 %1662
      %v1667 = vunpack.c.l.b16 %v1657
      %v1668 = vunpack.c.h.b16 %v1657
      %v1669 = vunpack.c.l.b16 %v1658
      %v1670 = vunpack.c.h.b16 %v1658
      %v1671 = vpack.c.b16 %v1669, %v1667
      %v1672 = vpack.c.b16 %v1670, %v1668
      %vm1675 = vcmask 130048
      %v1677 = vsel %vm1675, %v1656, 0
      %1679 = vmatprep.subr.bf16.mxu0 %v1672
      %1680 = vmatpush1.bf16.msra.mxu0 %v1671
      %1681 = vmatprep.subr.bf16.mxu0 0
      %1682 = vmatpush1.bf16.msra.mxu0 0
      %1683 = vmatprep.subr.bf16.mxu0 0
      %1684 = vmatpush1.bf16.msra.mxu0 0
      %1685 = vmatprep.subr.bf16.mxu0 0
      %1686 = vmatpush1.bf16.msra.mxu0 0
      %1687 = vmatprep.subr.bf16.mxu0 0
      %1688 = vmatpush1.bf16.msra.mxu0 0
      %1689 = vmatprep.subr.bf16.mxu0 0
      %1690 = vmatpush1.bf16.msra.mxu0 0
      %1691 = vmatprep.subr.bf16.mxu0 0
      %1692 = vmatpush1.bf16.msra.mxu0 0
      %1693 = vmatprep.subr.bf16.mxu0 0
      %1694 = vmatpush1.bf16.msra.mxu0 0
      %1695 = vmatprep.subr.bf16.mxu0 0
      %1696 = vmatpush1.bf16.msra.mxu0 0
      %1697 = vmatprep.subr.bf16.mxu0 0
      %1698 = vmatpush1.bf16.msra.mxu0 0
      %1699 = vmatprep.subr.bf16.mxu0 0
      %1700 = vmatpush1.bf16.msra.mxu0 0
      %1701 = vmatprep.subr.bf16.mxu0 0
      %1702 = vmatpush1.bf16.msra.mxu0 0
      %1703 = vmatprep.subr.bf16.mxu0 0
      %1704 = vmatpush1.bf16.msra.mxu0 0
      %1705 = vmatprep.subr.bf16.mxu0 0
      %1706 = vmatpush1.bf16.msra.mxu0 0
      %1707 = vmatprep.subr.bf16.mxu0 0
      %1708 = vmatpush1.bf16.msra.mxu0 0
      %1709 = vmatprep.subr.bf16.mxu0 0
      %1710 = vmatpush1.bf16.msra.mxu0 0
      %1711 = vmatprep.mubr.bf16.mxu0 0
      %1712 = vmatmul.mubr.bf16.gmra.mrb[0].mxu0 %v1677
      %v1713 = vpop.f32.mrb[0].mxu0
      %v1714 = vadd.f32 %v1663, %v1713
      %v1715 = vpop.f32.mrb[0].mxu0
      %v1716 = vadd.f32 %v1663, %v1715
      %v1717 = vpop.f32.mrb[0].mxu0
      %v1718 = vpop.f32.mrb[0].mxu0
      %1719 = vdwg.mxu0
      %v1720 = vmin.f32 %v1714, 20.0
      %v1721 = vmin.f32 %v1716, 20.0
      %v1722 = vmul.f32 %v1720, 1.442695
      %v1723 = vpow.pop %v1722
      %v1724 = vmul.f32 %v1721, 1.442695
      %v1725 = vpow.pop %v1724
      %v1726 = vadd.f32 %v1723, 1.0
      %v1727 = vadd.f32 %v1725, 1.0
      %v1728 = vmul.f32 %v1726, %v1726
      %v1729 = vmul.f32 %v1727, %v1727
      %v1730 = vsub.f32 %v1728, 1.0
      %v1731 = vsub.f32 %v1729, 1.0
      %v1732 = vmul.f32 %v1714, %v1730
      %v1733 = vmul.f32 %v1716, %v1731
      %v1734 = vadd.f32 %v1728, 1.0
      %v1735 = vadd.f32 %v1729, 1.0
      %v1736 = vrcp.pop %v1734
      %v1737 = vrcp.pop %v1735
      %v1738 = vmul.f32 %v1732, %v1736
      %v1739 = vmul.f32 %v1733, %v1737
      %v1740 = vpack.c.bf16 %v1738, %v1738
      %v1741 = vpack.c.bf16 %v1739, %v1739
      %v1744 = vcombine.low %v1740, %v1741
      %v1746 = vunpack.c.l.s4 1983009808
      %v1747 = vunpack.c.0.s8 %v1746
      %v1748 = vlaneseq
      %v1749 = vshrl.u32 %v1748, 7
      %v1750 = vsub.s32 %v1747, %v1749
      %v1751 = vrot.slane %v1744, %v1750
      %1753 = vst [vmem:[%s604] sm:$0xf] %v1751
      %s1754 = smul.u32 2, %s30
      %p1755 = scmp.lt.s32.totalorder %s1754, 3
      %s1756 = scalar_select %p1755, %s1754, 3
      %s1757 = smul.addr %s1756, 2
      %s1758 = scalar_lea.vmem %s19, %s1757
      // Predicated region
      $region97: #{_lambda_.1} parent=95 // pred_check
        %p1759 = pneg %p452
      $region98: #{_lambda_.1} parent=95 // pred_check_branch
        %1761 = sbr.rel (%p1759) target = $region100
      $region99: #{_lambda_.1} parent=95 // pred_region
        %s1762 = smul.u32 2, %s30
      $region100: #{_lambda_.1} parent=95 // pred_fallthru
        _
    $region96: #{_lambda_.1} parent=5 // pred_fallthru
      _
    %p1763 = scmp.le.s32.totalorder 2, %s25
    // Predicated region
    $region101: #{_lambda_.1} parent=5 // pred_check
      %p1764 = pneg %p1763
    $region102: #{_lambda_.1} parent=5 // pred_check_branch
      %1766 = sbr.rel (%p1764) target = $region104
    $region103: #{_lambda_.1} parent=5 // pred_region
      %s1767 = ssub.s32 %s25, 2
      // Predicated region
      $region105: #{_lambda_.1} parent=103 // pred_check
        %p1768 = pneg %p458
      $region106: #{_lambda_.1} parent=103 // pred_check_branch
        %1770 = sbr.rel (%p1768) target = $region108
      $region107: #{_lambda_.1} parent=103 // pred_region
        %s1771 = smul.u32 2, %s31
        %p1772 = scmp.lt.s32.totalorder %s1771, 3
        %s1773 = scalar_select %p1772, %s1771, 3
        %s1774 = smul.addr %s1773, 2
        %s1775 = scalar_lea.vmem %s19, %s1774
      $region108: #{_lambda_.1} parent=103 // pred_fallthru
        _
    $region104: #{_lambda_.1} parent=5 // pred_fallthru
      _
  $region6: #{_lambda_.1} parent=0 // loop_footer
    %s29 = sadd.s32 1, %s25
  $region7: #{_lambda_.1} parent=0 // loop_footer_branch
    %24 = sbr.rel target = $region3
  $region8: #{_lambda_.1} parent=0 // loop_exit
    _

</llo_original>
